<compile_context>
chip_gen: v7x
topology: tpu7x:2x2x1
jax: 0.10.0
libtpu: 0.0.40
codegen_flags: <defaults>
</compile_context>

<pallas_src>
import jax
import jax.numpy as jnp
from jax.experimental import pallas as pl
from jax.experimental.pallas import tpu as pltpu

H = 128          # LSTM hidden size
INPUT = 72       # raw feature count
INPUT_PAD = 128  # lane-aligned (zero-padded) feature count
OUT_PAD = 128    # lane-dense padded output width (real output = first 2 cols)


def _leaky_relu(x):
    # F.leaky_relu default negative_slope = 0.01
    return jnp.where(x >= 0, x, 0.01 * x)


def _round_up(n, m):
    return ((n + m - 1) // m) * m


def _sigmoid_1eup(x):
    # sigmoid(x) == 0.5*(tanh(x/2)+1): one EUP transcendental instead of
    # exp + reciprocal (exact rewrite).
    return 0.5 * (jnp.tanh(0.5 * x) + 1.0)


def _bilstm_step(x16, w_ref, b_ref):
    """Fused fwd+bwd single-timestep LSTM cell (h0=c0=0, forget gate pruned).

    x16:   (B, in_dim) bf16
    w_ref: (in_dim, 6H) bf16, columns ordered [i_f, i_b, g_f, g_b, o_f, o_b].
    b_ref: (1, 6H) f32 (= b_ih + b_hh, same column order).
    Returns (B, 2H) bf16 == concat(h_fwd, h_bwd) with no concatenate op.
    """
    g = jnp.dot(x16.astype(jnp.bfloat16), w_ref[...],
                preferred_element_type=jnp.float32) + b_ref[...]
    # bf16 gate math: 2x EUP/VPU throughput + half the vreg pressure on v6e/v7x
    # (v5e has no bf16 VPU/EUP; Mosaic upconverts there — correct, just not faster).
    g = g.astype(jnp.bfloat16)
    i = _sigmoid_1eup(g[:, 0:2 * H])
    gg = jnp.tanh(g[:, 2 * H:4 * H])
    o = _sigmoid_1eup(g[:, 4 * H:6 * H])
    return o * jnp.tanh(i * gg)                      # (B, 2H) bf16


def latlon_kernel(x_ref,
                  w0_ref, b0_ref, w1_ref, b1_ref,
                  fc1w_ref, fc1b_ref,
                  fc2w_ref, fc2b_ref, fc3w_ref, fc3b_ref,
                  out_ref):
    x = x_ref[...]                                   # (TB, 128) bf16, zero-padded

    # bidirectional LSTM layer 0 + layer 1 (seq_len == 1; inter-layer dropout
    # p=0.2 is identity in eval mode)
    l0 = _bilstm_step(x, w0_ref, b0_ref)             # (TB, 256) bf16
    l1 = _bilstm_step(l0, w1_ref, b1_ref)            # (TB, 256) == lstm_out[:, -1, :]

    # fc1 (BatchNorm1d eval affine folded into weights) -> leaky_relu -> +residual
    z = jnp.dot(l1, fc1w_ref[...],
                preferred_element_type=jnp.float32) + fc1b_ref[...]
    z = _leaky_relu(z) + l1.astype(jnp.float32)
    # dropout(p=0.3): eval mode -> identity

    z = _leaky_relu(jnp.dot(z.astype(jnp.bfloat16), fc2w_ref[...],
                            preferred_element_type=jnp.float32) + fc2b_ref[...])
    # fc3 padded to 128 lanes (cols 2..127 are exact zeros) -> lane-dense store
    out = jnp.dot(z.astype(jnp.bfloat16), fc3w_ref[...],
                  preferred_element_type=jnp.float32) + fc3b_ref[...]
    out_ref[...] = out.astype(out_ref.dtype)         # (TB, 128) bf16


def _pick_batch_tile(B):
    b8 = _round_up(B, 8)
    if b8 <= 256:
        # one tile: below this the ~0.35 us per-grid-step overhead dominates
        return b8
    # >= 2 grid steps so dimension_semantics=("parallel",) can shard the batch
    # axis across both v7x TensorCores; cap at 512 rows so the big-tile win
    # stays inside v5e's scoped VMEM (we also raise the limit to 32 MiB below).
    return min(512, _round_up(pl.cdiv(b8, 2), 16))


def latlon_forward(x, params, *, batch_tile=None):
    # NOTE: exact only for the module as written (x.unsqueeze(1) => seq_len==1,
    # h0=c0=0); W_hh and the forget gate are folded out on that basis.
    B = x.shape[0]
    if batch_tile is None:
        batch_tile = _pick_batch_tile(B)
    b_pad = _round_up(B, batch_tile)

    # zero-pad batch (ragged tile) and features (72 -> 128), cast to bf16
    xp = jnp.zeros((b_pad, INPUT_PAD), jnp.bfloat16)
    xp = xp.at[:B, :INPUT].set(x.astype(jnp.bfloat16))

    weights = (params["w0"], params["b0"], params["w1"], params["b1"],
               params["fc1w"], params["fc1b"],
               params["fc2w"], params["fc2b"], params["fc3w"], params["fc3b"])

    def resident(arr):
        # full-array block, same block index every grid step -> stays in VMEM
        # (weights total < 1 MiB; never re-DMA'd across grid steps)
        return pl.BlockSpec(arr.shape, lambda i, _n=arr.ndim: (0,) * _n)

    out = pl.pallas_call(
        latlon_kernel,
        out_shape=jax.ShapeDtypeStruct((b_pad, OUT_PAD), jnp.bfloat16),
        grid=(b_pad // batch_tile,),
        in_specs=[pl.BlockSpec((batch_tile, INPUT_PAD), lambda i: (i, 0))]
                 + [resident(w) for w in weights],
        out_specs=pl.BlockSpec((batch_tile, OUT_PAD), lambda i: (i, 0)),
        compiler_params=pltpu.CompilerParams(
            dimension_semantics=("parallel",),       # both TCs on v7x
            vmem_limit_bytes=32 * 1024 * 1024),      # lift v5e's 16 MiB default
    )(xp, *weights)
    return out[:B, :2].astype(jnp.float32)


def init_params(key):
    """Deterministic synthetic parameters with PyTorch-default init ranges,
    pre-transformed into the fused / pruned / padded / BN-folded kernel layout."""
    keys = iter(jax.random.split(key, 24))

    def unif(shape, scale):
        return jax.random.uniform(next(keys), shape, jnp.float32, -scale, scale)

    def prune_t(w_ih):
        # PyTorch gate order i, f, g, o; drop f (multiplies c0==0), transpose.
        return (jnp.transpose(w_ih[0 * H:1 * H]),    # i : (in, H)
                jnp.transpose(w_ih[2 * H:3 * H]),    # g
                jnp.transpose(w_ih[3 * H:4 * H]))    # o

    def prune_b(b):
        return b[0 * H:1 * H], b[2 * H:3 * H], b[3 * H:4 * H]

    params = {}
    k = 1.0 / jnp.sqrt(jnp.float32(H))
    for layer, in_dim in ((0, INPUT), (1, 2 * H)):
        # per-direction PyTorch-shaped weights; W_hh never used (h0==0),
        # b_hh folded into the single bias.
        wf_i, wf_g, wf_o = prune_t(unif((4 * H, in_dim), k))
        bf_i, bf_g, bf_o = prune_b(unif((4 * H,), k) + unif((4 * H,), k))
        wb_i, wb_g, wb_o = prune_t(unif((4 * H, in_dim), k))
        bb_i, bb_g, bb_o = prune_b(unif((4 * H,), k) + unif((4 * H,), k))
        w = jnp.concatenate([wf_i, wb_i, wf_g, wb_g, wf_o, wb_o], axis=1)  # (in, 6H)
        b = jnp.concatenate([bf_i, bb_i, bf_g, bb_g, bf_o, bb_o]).reshape(1, 6 * H)
        if layer == 0:
            w = jnp.pad(w, ((0, INPUT_PAD - INPUT), (0, 0)))               # 72 -> 128 rows
        params[f"w{layer}"] = w.astype(jnp.bfloat16)
        params[f"b{layer}"] = b                                            # f32

    # Linear layers, PyTorch shapes W (out, in), b (out,) -> transposed, bf16 weights
    def linear(out_d, in_d):
        kk = 1.0 / jnp.sqrt(jnp.float32(in_d))
        return jnp.transpose(unif((out_d, in_d), kk)), unif((out_d,), kk)

    # BatchNorm1d(256), eval mode, default state (gamma=1, beta=0, mean=0, var=1),
    # folded into fc1 offline: W' = W * scale (per output col), b' = b*scale + shift.
    eps = 1e-5
    gamma = jnp.ones((256,), jnp.float32)
    beta = jnp.zeros((256,), jnp.float32)
    rmean = jnp.zeros((256,), jnp.float32)
    rvar = jnp.ones((256,), jnp.float32)
    scale = gamma / jnp.sqrt(rvar + eps)
    shift = beta - rmean * scale
    w, b = linear(256, 256)
    params["fc1w"] = (w * scale[None, :]).astype(jnp.bfloat16)
    params["fc1b"] = (b * scale + shift).reshape(1, 256)

    w, b = linear(128, 256)
    params["fc2w"] = w.astype(jnp.bfloat16)
    params["fc2b"] = b.reshape(1, 128)
    w, b = linear(2, 128)
    params["fc3w"] = jnp.pad(w, ((0, 0), (0, OUT_PAD - 2))).astype(jnp.bfloat16)  # (128, 128)
    params["fc3b"] = jnp.pad(b, (0, OUT_PAD - 2)).reshape(1, OUT_PAD)
    return params


def reference_forward(x, params):
    """Pure-JAX (XLA) f32 reference using the same fused/pruned/folded parameters."""
    B = x.shape[0]
    xp = jnp.zeros((B, INPUT_PAD), jnp.float32).at[:, :INPUT].set(x)
    xp = xp.astype(jnp.bfloat16).astype(jnp.float32)

    def bilstm(h, w, b):
        g = h @ w.astype(jnp.float32) + b
        i = jax.nn.sigmoid(g[:, :2 * H])
        gg = jnp.tanh(g[:, 2 * H:4 * H])
        o = jax.nn.sigmoid(g[:, 4 * H:])
        return o * jnp.tanh(i * gg)

    l0 = bilstm(xp, params["w0"], params["b0"])
    l1 = bilstm(l0, params["w1"], params["b1"])
    z = l1 @ params["fc1w"].astype(jnp.float32) + params["fc1b"]   # BN folded
    z = _leaky_relu(z) + l1
    z = _leaky_relu(z @ params["fc2w"].astype(jnp.float32) + params["fc2b"])
    out = z @ params["fc3w"].astype(jnp.float32) + params["fc3b"]
    return out[:, :2]


if __name__ == "__main__":
    key = jax.random.PRNGKey(0)
    kx, kp = jax.random.split(key)
    B = 8
    x = jax.random.normal(kx, (B, INPUT), jnp.float32)
    params = init_params(kp)

    out = latlon_forward(x, params)
    jax.block_until_ready(out)

    assert out.shape == (B, 2) and out.dtype == jnp.float32
    assert bool(jnp.all(jnp.isfinite(out)))
    ref = reference_forward(x, params)
    assert float(jnp.max(jnp.abs(out - ref))) < 0.1, "kernel deviates from reference"
    print("KERNEL_OK")
</pallas_src>

<mosaic_0001>
module attributes {stable_mosaic.version = 11 : i64} {
  func.func @latlon_kernel(%arg0: i32, %arg1: memref<8x128xbf16, #tpu.memory_space<vmem>>, %arg2: memref<128x768xbf16, #tpu.memory_space<vmem>>, %arg3: memref<1x768xf32, #tpu.memory_space<vmem>>, %arg4: memref<256x768xbf16, #tpu.memory_space<vmem>>, %arg5: memref<1x768xf32, #tpu.memory_space<vmem>>, %arg6: memref<256x256xbf16, #tpu.memory_space<vmem>>, %arg7: memref<1x256xf32, #tpu.memory_space<vmem>>, %arg8: memref<256x128xbf16, #tpu.memory_space<vmem>>, %arg9: memref<1x128xf32, #tpu.memory_space<vmem>>, %arg10: memref<128x128xbf16, #tpu.memory_space<vmem>>, %arg11: memref<1x128xf32, #tpu.memory_space<vmem>>, %arg12: memref<8x128xbf16, #tpu.memory_space<vmem>>) attributes {dimension_semantics = [#tpu.dimension_semantics<parallel>], iteration_bounds = array<i64: 1>, scalar_prefetch = 0 : i64, scratch_operands = 0 : i64, tpu.core_type = #tpu.core_type<tc>, window_params = [{transform_indices = @transform_0, window_bounds = array<i64: 8, 128>}, {pipeline_mode = #tpu.pipeline_mode<synchronous>, transform_indices = @transform_1, window_bounds = array<i64: 128, 768>}, {pipeline_mode = #tpu.pipeline_mode<synchronous>, transform_indices = @transform_2, window_bounds = array<i64: 1, 768>}, {pipeline_mode = #tpu.pipeline_mode<synchronous>, transform_indices = @transform_3, window_bounds = array<i64: 256, 768>}, {pipeline_mode = #tpu.pipeline_mode<synchronous>, transform_indices = @transform_4, window_bounds = array<i64: 1, 768>}, {pipeline_mode = #tpu.pipeline_mode<synchronous>, transform_indices = @transform_5, window_bounds = array<i64: 256, 256>}, {pipeline_mode = #tpu.pipeline_mode<synchronous>, transform_indices = @transform_6, window_bounds = array<i64: 1, 256>}, {pipeline_mode = #tpu.pipeline_mode<synchronous>, transform_indices = @transform_7, window_bounds = array<i64: 256, 128>}, {pipeline_mode = #tpu.pipeline_mode<synchronous>, transform_indices = @transform_8, window_bounds = array<i64: 1, 128>}, {pipeline_mode = #tpu.pipeline_mode<synchronous>, transform_indices = @transform_9, window_bounds = array<i64: 128, 128>}, {pipeline_mode = #tpu.pipeline_mode<synchronous>, transform_indices = @transform_10, window_bounds = array<i64: 1, 128>}, {transform_indices = @transform_11, window_bounds = array<i64: 8, 128>}]} {
    %c0 = arith.constant 0 : index
    %c0_0 = arith.constant 0 : index
    %0 = vector.load %arg1[%c0, %c0_0] : memref<8x128xbf16, #tpu.memory_space<vmem>>, vector<8x128xbf16>
    %c0_1 = arith.constant 0 : index
    %c0_2 = arith.constant 0 : index
    %1 = vector.load %arg2[%c0_1, %c0_2] : memref<128x768xbf16, #tpu.memory_space<vmem>>, vector<128x768xbf16>
    %cst = arith.constant dense<0.000000e+00> : vector<8x768xf32>
    %2 = tpu.matmul %0, %1, %cst {dimension_numbers = #tpu.dot_dimension_numbers<[1], [0], [0], [1], [0, 0, 1, 1], [], []>} : vector<8x128xbf16>, vector<128x768xbf16>, vector<8x768xf32> -> vector<8x768xf32>
    %c0_3 = arith.constant 0 : index
    %c0_4 = arith.constant 0 : index
    %3 = vector.load %arg3[%c0_3, %c0_4] : memref<1x768xf32, #tpu.memory_space<vmem>>, vector<1x768xf32>
    %4 = vector.broadcast %3 : vector<1x768xf32> to vector<8x768xf32>
    %5 = arith.addf %2, %4 : vector<8x768xf32>
    %6 = arith.truncf %5 : vector<8x768xf32> to vector<8x768xbf16>
    %7 = vector.extract_strided_slice %6 {offsets = [0, 0], sizes = [8, 256], strides = [1, 1]} : vector<8x768xbf16> to vector<8x256xbf16>
    %cst_5 = arith.constant 5.000000e-01 : bf16
    %8 = vector.broadcast %cst_5 : bf16 to vector<8x256xbf16>
    %9 = arith.mulf %8, %7 : vector<8x256xbf16>
    %10 = math.tanh %9 : vector<8x256xbf16>
    %cst_6 = arith.constant 1.000000e+00 : bf16
    %11 = vector.broadcast %cst_6 : bf16 to vector<8x256xbf16>
    %12 = arith.addf %10, %11 : vector<8x256xbf16>
    %cst_7 = arith.constant 5.000000e-01 : bf16
    %13 = vector.broadcast %cst_7 : bf16 to vector<8x256xbf16>
    %14 = arith.mulf %13, %12 : vector<8x256xbf16>
    %15 = vector.extract_strided_slice %6 {offsets = [0, 256], sizes = [8, 256], strides = [1, 1]} : vector<8x768xbf16> to vector<8x256xbf16>
    %16 = math.tanh %15 : vector<8x256xbf16>
    %17 = vector.extract_strided_slice %6 {offsets = [0, 512], sizes = [8, 256], strides = [1, 1]} : vector<8x768xbf16> to vector<8x256xbf16>
    %cst_8 = arith.constant 5.000000e-01 : bf16
    %18 = vector.broadcast %cst_8 : bf16 to vector<8x256xbf16>
    %19 = arith.mulf %18, %17 : vector<8x256xbf16>
    %20 = math.tanh %19 : vector<8x256xbf16>
    %cst_9 = arith.constant 1.000000e+00 : bf16
    %21 = vector.broadcast %cst_9 : bf16 to vector<8x256xbf16>
    %22 = arith.addf %20, %21 : vector<8x256xbf16>
    %cst_10 = arith.constant 5.000000e-01 : bf16
    %23 = vector.broadcast %cst_10 : bf16 to vector<8x256xbf16>
    %24 = arith.mulf %23, %22 : vector<8x256xbf16>
    %25 = arith.mulf %14, %16 : vector<8x256xbf16>
    %26 = math.tanh %25 : vector<8x256xbf16>
    %27 = arith.mulf %24, %26 : vector<8x256xbf16>
    %c0_11 = arith.constant 0 : index
    %c0_12 = arith.constant 0 : index
    %28 = vector.load %arg4[%c0_11, %c0_12] : memref<256x768xbf16, #tpu.memory_space<vmem>>, vector<256x768xbf16>
    %cst_13 = arith.constant dense<0.000000e+00> : vector<8x768xf32>
    %29 = tpu.matmul %27, %28, %cst_13 {dimension_numbers = #tpu.dot_dimension_numbers<[1], [0], [0], [1], [0, 0, 1, 1], [], []>} : vector<8x256xbf16>, vector<256x768xbf16>, vector<8x768xf32> -> vector<8x768xf32>
    %c0_14 = arith.constant 0 : index
    %c0_15 = arith.constant 0 : index
    %30 = vector.load %arg5[%c0_14, %c0_15] : memref<1x768xf32, #tpu.memory_space<vmem>>, vector<1x768xf32>
    %31 = vector.broadcast %30 : vector<1x768xf32> to vector<8x768xf32>
    %32 = arith.addf %29, %31 : vector<8x768xf32>
    %33 = arith.truncf %32 : vector<8x768xf32> to vector<8x768xbf16>
    %34 = vector.extract_strided_slice %33 {offsets = [0, 0], sizes = [8, 256], strides = [1, 1]} : vector<8x768xbf16> to vector<8x256xbf16>
    %cst_16 = arith.constant 5.000000e-01 : bf16
    %35 = vector.broadcast %cst_16 : bf16 to vector<8x256xbf16>
    %36 = arith.mulf %35, %34 : vector<8x256xbf16>
    %37 = math.tanh %36 : vector<8x256xbf16>
    %cst_17 = arith.constant 1.000000e+00 : bf16
    %38 = vector.broadcast %cst_17 : bf16 to vector<8x256xbf16>
    %39 = arith.addf %37, %38 : vector<8x256xbf16>
    %cst_18 = arith.constant 5.000000e-01 : bf16
    %40 = vector.broadcast %cst_18 : bf16 to vector<8x256xbf16>
    %41 = arith.mulf %40, %39 : vector<8x256xbf16>
    %42 = vector.extract_strided_slice %33 {offsets = [0, 256], sizes = [8, 256], strides = [1, 1]} : vector<8x768xbf16> to vector<8x256xbf16>
    %43 = math.tanh %42 : vector<8x256xbf16>
    %44 = vector.extract_strided_slice %33 {offsets = [0, 512], sizes = [8, 256], strides = [1, 1]} : vector<8x768xbf16> to vector<8x256xbf16>
    %cst_19 = arith.constant 5.000000e-01 : bf16
    %45 = vector.broadcast %cst_19 : bf16 to vector<8x256xbf16>
    %46 = arith.mulf %45, %44 : vector<8x256xbf16>
    %47 = math.tanh %46 : vector<8x256xbf16>
    %cst_20 = arith.constant 1.000000e+00 : bf16
    %48 = vector.broadcast %cst_20 : bf16 to vector<8x256xbf16>
    %49 = arith.addf %47, %48 : vector<8x256xbf16>
    %cst_21 = arith.constant 5.000000e-01 : bf16
    %50 = vector.broadcast %cst_21 : bf16 to vector<8x256xbf16>
    %51 = arith.mulf %50, %49 : vector<8x256xbf16>
    %52 = arith.mulf %41, %43 : vector<8x256xbf16>
    %53 = math.tanh %52 : vector<8x256xbf16>
    %54 = arith.mulf %51, %53 : vector<8x256xbf16>
    %c0_22 = arith.constant 0 : index
    %c0_23 = arith.constant 0 : index
    %55 = vector.load %arg6[%c0_22, %c0_23] : memref<256x256xbf16, #tpu.memory_space<vmem>>, vector<256x256xbf16>
    %cst_24 = arith.constant dense<0.000000e+00> : vector<8x256xf32>
    %56 = tpu.matmul %54, %55, %cst_24 {dimension_numbers = #tpu.dot_dimension_numbers<[1], [0], [0], [1], [0, 0, 1, 1], [], []>} : vector<8x256xbf16>, vector<256x256xbf16>, vector<8x256xf32> -> vector<8x256xf32>
    %c0_25 = arith.constant 0 : index
    %c0_26 = arith.constant 0 : index
    %57 = vector.load %arg7[%c0_25, %c0_26] : memref<1x256xf32, #tpu.memory_space<vmem>>, vector<1x256xf32>
    %58 = vector.broadcast %57 : vector<1x256xf32> to vector<8x256xf32>
    %59 = arith.addf %56, %58 : vector<8x256xf32>
    %cst_27 = arith.constant 0.000000e+00 : f32
    %60 = vector.broadcast %cst_27 : f32 to vector<8x256xf32>
    %61 = arith.cmpf oge, %59, %60 : vector<8x256xf32>
    %cst_28 = arith.constant 0.00999999977 : f32
    %62 = vector.broadcast %cst_28 : f32 to vector<8x256xf32>
    %63 = arith.mulf %62, %59 : vector<8x256xf32>
    %64 = arith.select %61, %59, %63 : vector<8x256xi1>, vector<8x256xf32>
    %65 = arith.extf %54 : vector<8x256xbf16> to vector<8x256xf32>
    %66 = arith.addf %64, %65 : vector<8x256xf32>
    %67 = arith.truncf %66 : vector<8x256xf32> to vector<8x256xbf16>
    %c0_29 = arith.constant 0 : index
    %c0_30 = arith.constant 0 : index
    %68 = vector.load %arg8[%c0_29, %c0_30] : memref<256x128xbf16, #tpu.memory_space<vmem>>, vector<256x128xbf16>
    %cst_31 = arith.constant dense<0.000000e+00> : vector<8x128xf32>
    %69 = tpu.matmul %67, %68, %cst_31 {dimension_numbers = #tpu.dot_dimension_numbers<[1], [0], [0], [1], [0, 0, 1, 1], [], []>} : vector<8x256xbf16>, vector<256x128xbf16>, vector<8x128xf32> -> vector<8x128xf32>
    %c0_32 = arith.constant 0 : index
    %c0_33 = arith.constant 0 : index
    %70 = vector.load %arg9[%c0_32, %c0_33] : memref<1x128xf32, #tpu.memory_space<vmem>>, vector<1x128xf32>
    %71 = vector.broadcast %70 : vector<1x128xf32> to vector<8x128xf32>
    %72 = arith.addf %69, %71 : vector<8x128xf32>
    %cst_34 = arith.constant 0.000000e+00 : f32
    %73 = vector.broadcast %cst_34 : f32 to vector<8x128xf32>
    %74 = arith.cmpf oge, %72, %73 : vector<8x128xf32>
    %cst_35 = arith.constant 0.00999999977 : f32
    %75 = vector.broadcast %cst_35 : f32 to vector<8x128xf32>
    %76 = arith.mulf %75, %72 : vector<8x128xf32>
    %77 = arith.select %74, %72, %76 : vector<8x128xi1>, vector<8x128xf32>
    %78 = arith.truncf %77 : vector<8x128xf32> to vector<8x128xbf16>
    %c0_36 = arith.constant 0 : index
    %c0_37 = arith.constant 0 : index
    %79 = vector.load %arg10[%c0_36, %c0_37] : memref<128x128xbf16, #tpu.memory_space<vmem>>, vector<128x128xbf16>
    %cst_38 = arith.constant dense<0.000000e+00> : vector<8x128xf32>
    %80 = tpu.matmul %78, %79, %cst_38 {dimension_numbers = #tpu.dot_dimension_numbers<[1], [0], [0], [1], [0, 0, 1, 1], [], []>} : vector<8x128xbf16>, vector<128x128xbf16>, vector<8x128xf32> -> vector<8x128xf32>
    %c0_39 = arith.constant 0 : index
    %c0_40 = arith.constant 0 : index
    %81 = vector.load %arg11[%c0_39, %c0_40] : memref<1x128xf32, #tpu.memory_space<vmem>>, vector<1x128xf32>
    %82 = vector.broadcast %81 : vector<1x128xf32> to vector<8x128xf32>
    %83 = arith.addf %80, %82 : vector<8x128xf32>
    %84 = arith.truncf %83 : vector<8x128xf32> to vector<8x128xbf16>
    %c0_41 = arith.constant 0 : index
    %c0_42 = arith.constant 0 : index
    %85 = vector.load %arg12[%c0_41, %c0_42] : memref<8x128xbf16, #tpu.memory_space<vmem>>, vector<8x128xbf16>
    tpu.vector_store %arg12[%c0_41, %c0_42], %84 {strides = array<i32>} : memref<8x128xbf16, #tpu.memory_space<vmem>>, vector<8x128xbf16>,
    return
  }
  func.func @transform_0(%arg0: i32) -> (i32, i32) {
    %c0_i32 = arith.constant 0 : i32
    %c0_i32_0 = arith.constant 0 : i32
    return %arg0, %c0_i32 : i32, i32
  }
  func.func @transform_1(%arg0: i32) -> (i32, i32) {
    %c0_i32 = arith.constant 0 : i32
    %c0_i32_0 = arith.constant 0 : i32
    %c0_i32_1 = arith.constant 0 : i32
    return %c0_i32, %c0_i32_0 : i32, i32
  }
  func.func @transform_2(%arg0: i32) -> (i32, i32) {
    %c0_i32 = arith.constant 0 : i32
    %c0_i32_0 = arith.constant 0 : i32
    %c0_i32_1 = arith.constant 0 : i32
    return %c0_i32, %c0_i32_0 : i32, i32
  }
  func.func @transform_3(%arg0: i32) -> (i32, i32) {
    %c0_i32 = arith.constant 0 : i32
    %c0_i32_0 = arith.constant 0 : i32
    %c0_i32_1 = arith.constant 0 : i32
    return %c0_i32, %c0_i32_0 : i32, i32
  }
  func.func @transform_4(%arg0: i32) -> (i32, i32) {
    %c0_i32 = arith.constant 0 : i32
    %c0_i32_0 = arith.constant 0 : i32
    %c0_i32_1 = arith.constant 0 : i32
    return %c0_i32, %c0_i32_0 : i32, i32
  }
  func.func @transform_5(%arg0: i32) -> (i32, i32) {
    %c0_i32 = arith.constant 0 : i32
    %c0_i32_0 = arith.constant 0 : i32
    %c0_i32_1 = arith.constant 0 : i32
    return %c0_i32, %c0_i32_0 : i32, i32
  }
  func.func @transform_6(%arg0: i32) -> (i32, i32) {
    %c0_i32 = arith.constant 0 : i32
    %c0_i32_0 = arith.constant 0 : i32
    %c0_i32_1 = arith.constant 0 : i32
    return %c0_i32, %c0_i32_0 : i32, i32
  }
  func.func @transform_7(%arg0: i32) -> (i32, i32) {
    %c0_i32 = arith.constant 0 : i32
    %c0_i32_0 = arith.constant 0 : i32
    %c0_i32_1 = arith.constant 0 : i32
    return %c0_i32, %c0_i32_0 : i32, i32
  }
  func.func @transform_8(%arg0: i32) -> (i32, i32) {
    %c0_i32 = arith.constant 0 : i32
    %c0_i32_0 = arith.constant 0 : i32
    %c0_i32_1 = arith.constant 0 : i32
    return %c0_i32, %c0_i32_0 : i32, i32
  }
  func.func @transform_9(%arg0: i32) -> (i32, i32) {
    %c0_i32 = arith.constant 0 : i32
    %c0_i32_0 = arith.constant 0 : i32
    %c0_i32_1 = arith.constant 0 : i32
    return %c0_i32, %c0_i32_0 : i32, i32
  }
  func.func @transform_10(%arg0: i32) -> (i32, i32) {
    %c0_i32 = arith.constant 0 : i32
    %c0_i32_0 = arith.constant 0 : i32
    %c0_i32_1 = arith.constant 0 : i32
    return %c0_i32, %c0_i32_0 : i32, i32
  }
  func.func @transform_11(%arg0: i32) -> (i32, i32) {
    %c0_i32 = arith.constant 0 : i32
    %c0_i32_0 = arith.constant 0 : i32
    return %arg0, %c0_i32 : i32, i32
  }
}

</mosaic_0001>

<llo_original>
// kernel: tpu_custom_call.1
$region0: #{tpu_custom_call.1}
  #allocation0 [shape = 'u32[]', space=smem, size = 0x4, offset = 0x4, fixed_abs, tag = 'smem constant byte address 0x4 - core index']
  #allocation1 [shape = 'u32[144,128]{1,0:T(1,128)}', space=vmem, size = 0x12000, scoped, tag = 'internal scratch']
  %s0 = inlined_call_operand.hbm [shape: bf16[8,128], index: 0, kind: input, shape index: {}]
  %s1 = inlined_call_operand.hbm [shape: bf16[128,768], index: 1, kind: input, shape index: {}]
  %s2 = inlined_call_operand.vmem [shape: f32[1,768], index: 2, kind: input, shape index: {}]
  %s3 = inlined_call_operand.hbm [shape: bf16[256,768], index: 3, kind: input, shape index: {}]
  %s4 = inlined_call_operand.vmem [shape: f32[1,768], index: 4, kind: input, shape index: {}]
  %s5 = inlined_call_operand.hbm [shape: bf16[256,256], index: 5, kind: input, shape index: {}]
  %s6 = inlined_call_operand.vmem [shape: f32[1,256], index: 6, kind: input, shape index: {}]
  %s7 = inlined_call_operand.hbm [shape: bf16[256,128], index: 7, kind: input, shape index: {}]
  %s8 = inlined_call_operand.vmem [shape: f32[1,128], index: 8, kind: input, shape index: {}]
  %s9 = inlined_call_operand.hbm [shape: bf16[128,128], index: 9, kind: input, shape index: {}]
  %s10 = inlined_call_operand.vmem [shape: f32[1,128], index: 10, kind: input, shape index: {}]
  %s11 = inlined_call_operand.hbm [shape: bf16[8,128], index: 11, kind: output, shape index: {}]
  %s12 = sld [smem:[#allocation0]]
  $region78: #{tpu_custom_call.1} parent=0
    _
  %s14 = ssub.s32 1, %s12
  %s15 = scalar_select 0, %s14, %s12
  $region1: #{tpu_custom_call.1} parent=0
    #allocation2 [shape = 'u8[2048]{0}', space=vmem, size = 0x800, scoped, tag = 'input window, operand 0, single buffered']
    #allocation3 [shape = 's32[1]{0}', space=sflag, size = 0x4, scoped, tag = 'scoped memory for tpu_custom_call.1']
    #allocation4 [shape = 's32[1]{0}', space=sflag, size = 0x4, scoped, tag = 'scoped memory for tpu_custom_call.1']
    #allocation5 [shape = 'u8[196608]{0}', space=vmem, size = 0x30000, scoped, tag = 'input window, operand 1, single buffered']
    #allocation6 [shape = 's32[1]{0}', space=sflag, size = 0x4, scoped, tag = 'scoped memory for tpu_custom_call.1']
    #allocation7 [shape = 'u8[393216]{0}', space=vmem, size = 0x60000, scoped, tag = 'input window, operand 3, single buffered']
    #allocation8 [shape = 'u8[131072]{0}', space=vmem, size = 0x20000, scoped, tag = 'input window, operand 5, single buffered']
    #allocation9 [shape = 's32[1]{0}', space=sflag, size = 0x4, scoped, tag = 'scoped memory for tpu_custom_call.1']
    #allocation10 [shape = 'u8[65536]{0}', space=vmem, size = 0x10000, scoped, tag = 'input window, operand 7, single buffered']
    #allocation11 [shape = 'u8[32768]{0}', space=vmem, size = 0x8000, scoped, tag = 'input window, operand 9, single buffered']
    #allocation12 [shape = 's32[1]{0}', space=sflag, size = 0x4, scoped, tag = 'scoped memory for tpu_custom_call.1']
    #allocation13 [shape = 'u8[2048]{0}', space=vmem, size = 0x800, scoped, tag = 'output window, operand 0, single buffered']
    %16 = vsyncpa [#allocation3], 0
    %17 = vsyncpa [#allocation6], 0
    %18 = vsyncpa [#allocation9], 0
    %19 = vsyncpa [#allocation12], 0
    %20 = vsyncpa [#allocation4], 0
    // Predicated region
    $region2: #{tpu_custom_call.1} parent=1 // pred_check
      _
    $region3: #{tpu_custom_call.1} parent=1 // pred_check_branch
      %22 = sbr.rel (0) target = $region5
    $region4: #{tpu_custom_call.1} parent=1 // pred_region
      %s24 = ssub.s32 64, 64
      %25 = vsyncadd [#allocation3], %s24
      %s27 = sshll.u32 [#allocation2], 4
      %s28 = int_to_ptr.vmem [resolvable:$true] %s27
      %30 = dma.hbm_to_vmem [thread:$0]  %s0, 64, %s28, [#allocation3]
    $region5: #{tpu_custom_call.1} parent=1 // pred_fallthru
      _
    // Predicated region
    $region6: #{tpu_custom_call.1} parent=1 // pred_check
      _
    $region7: #{tpu_custom_call.1} parent=1 // pred_check_branch
      %32 = sbr.rel (0) target = $region9
    $region8: #{tpu_custom_call.1} parent=1 // pred_region
      %s34 = ssub.s32 6144, 6144
      %35 = vsyncadd [#allocation6], %s34
      %s36 = sshll.u32 [#allocation5], 4
      %s37 = int_to_ptr.vmem [resolvable:$true] %s36
      %42 = dma.hbm_to_vmem [thread:$0]  %s1, 6144, %s37, [#allocation6], 384, 384, 24
    $region9: #{tpu_custom_call.1} parent=1 // pred_fallthru
      _
    // Predicated region
    $region10: #{tpu_custom_call.1} parent=1 // pred_check
      _
    $region11: #{tpu_custom_call.1} parent=1 // pred_check_branch
      %44 = sbr.rel (0) target = $region13
    $region12: #{tpu_custom_call.1} parent=1 // pred_region
      _
    $region13: #{tpu_custom_call.1} parent=1 // pred_fallthru
      _
    // Predicated region
    $region14: #{tpu_custom_call.1} parent=1 // pred_check
      _
    $region15: #{tpu_custom_call.1} parent=1 // pred_check_branch
      %46 = sbr.rel (0) target = $region17
    $region16: #{tpu_custom_call.1} parent=1 // pred_region
      %s48 = ssub.s32 12288, 12288
      %49 = vsyncadd [#allocation6], %s48
      %s50 = sshll.u32 [#allocation7], 4
      %s51 = int_to_ptr.vmem [resolvable:$true] %s50
      %56 = dma.hbm_to_vmem [thread:$0]  %s3, 12288, %s51, [#allocation6], 384, 384, 24
    $region17: #{tpu_custom_call.1} parent=1 // pred_fallthru
      _
    // Predicated region
    $region18: #{tpu_custom_call.1} parent=1 // pred_check
      _
    $region19: #{tpu_custom_call.1} parent=1 // pred_check_branch
      %58 = sbr.rel (0) target = $region21
    $region20: #{tpu_custom_call.1} parent=1 // pred_region
      _
    $region21: #{tpu_custom_call.1} parent=1 // pred_fallthru
      _
    // Predicated region
    $region22: #{tpu_custom_call.1} parent=1 // pred_check
      _
    $region23: #{tpu_custom_call.1} parent=1 // pred_check_branch
      %60 = sbr.rel (0) target = $region25
    $region24: #{tpu_custom_call.1} parent=1 // pred_region
      %s62 = ssub.s32 4096, 4096
      %63 = vsyncadd [#allocation9], %s62
      %s64 = sshll.u32 [#allocation8], 4
      %s65 = int_to_ptr.vmem [resolvable:$true] %s64
      %70 = dma.hbm_to_vmem [thread:$0]  %s5, 4096, %s65, [#allocation9], 128, 128, 8
    $region25: #{tpu_custom_call.1} parent=1 // pred_fallthru
      _
    // Predicated region
    $region26: #{tpu_custom_call.1} parent=1 // pred_check
      _
    $region27: #{tpu_custom_call.1} parent=1 // pred_check_branch
      %72 = sbr.rel (0) target = $region29
    $region28: #{tpu_custom_call.1} parent=1 // pred_region
      _
    $region29: #{tpu_custom_call.1} parent=1 // pred_fallthru
      _
    // Predicated region
    $region30: #{tpu_custom_call.1} parent=1 // pred_check
      _
    $region31: #{tpu_custom_call.1} parent=1 // pred_check_branch
      %74 = sbr.rel (0) target = $region33
    $region32: #{tpu_custom_call.1} parent=1 // pred_region
      %s76 = ssub.s32 2048, 2048
      %77 = vsyncadd [#allocation9], %s76
      %s78 = sshll.u32 [#allocation10], 4
      %s79 = int_to_ptr.vmem [resolvable:$true] %s78
      %84 = dma.hbm_to_vmem [thread:$0]  %s7, 2048, %s79, [#allocation9], 64, 64, 4
    $region33: #{tpu_custom_call.1} parent=1 // pred_fallthru
      _
    // Predicated region
    $region34: #{tpu_custom_call.1} parent=1 // pred_check
      _
    $region35: #{tpu_custom_call.1} parent=1 // pred_check_branch
      %86 = sbr.rel (0) target = $region37
    $region36: #{tpu_custom_call.1} parent=1 // pred_region
      _
    $region37: #{tpu_custom_call.1} parent=1 // pred_fallthru
      _
    // Predicated region
    $region38: #{tpu_custom_call.1} parent=1 // pred_check
      _
    $region39: #{tpu_custom_call.1} parent=1 // pred_check_branch
      %88 = sbr.rel (0) target = $region41
    $region40: #{tpu_custom_call.1} parent=1 // pred_region
      %s90 = ssub.s32 1024, 1024
      %91 = vsyncadd [#allocation12], %s90
      %s92 = sshll.u32 [#allocation11], 4
      %s93 = int_to_ptr.vmem [resolvable:$true] %s92
      %98 = dma.hbm_to_vmem [thread:$0]  %s9, 1024, %s93, [#allocation12], 64, 64, 4
    $region41: #{tpu_custom_call.1} parent=1 // pred_fallthru
      _
    // Predicated region
    $region42: #{tpu_custom_call.1} parent=1 // pred_check
      _
    $region43: #{tpu_custom_call.1} parent=1 // pred_check_branch
      %100 = sbr.rel (0) target = $region45
    $region44: #{tpu_custom_call.1} parent=1 // pred_region
      _
    $region45: #{tpu_custom_call.1} parent=1 // pred_fallthru
      _
    // Predicated region
    $region46: #{tpu_custom_call.1} parent=1 // pred_check
      _
    $region47: #{tpu_custom_call.1} parent=1 // pred_check_branch
      %102 = sbr.rel (0) target = $region49
    $region48: #{tpu_custom_call.1} parent=1 // pred_region
      %103 = dma.done [#allocation3], 64
    $region49: #{tpu_custom_call.1} parent=1 // pred_fallthru
      _
    // Predicated region
    $region50: #{tpu_custom_call.1} parent=1 // pred_check
      _
    $region51: #{tpu_custom_call.1} parent=1 // pred_check_branch
      %105 = sbr.rel (0) target = $region53
    $region52: #{tpu_custom_call.1} parent=1 // pred_region
      %106 = dma.done [#allocation6], 6144
    $region53: #{tpu_custom_call.1} parent=1 // pred_fallthru
      _
    // Predicated region
    $region54: #{tpu_custom_call.1} parent=1 // pred_check
      _
    $region55: #{tpu_custom_call.1} parent=1 // pred_check_branch
      %108 = sbr.rel (0) target = $region57
    $region56: #{tpu_custom_call.1} parent=1 // pred_region
      %109 = dma.done [#allocation6], 12288
    $region57: #{tpu_custom_call.1} parent=1 // pred_fallthru
      _
    // Predicated region
    $region58: #{tpu_custom_call.1} parent=1 // pred_check
      _
    $region59: #{tpu_custom_call.1} parent=1 // pred_check_branch
      %111 = sbr.rel (0) target = $region61
    $region60: #{tpu_custom_call.1} parent=1 // pred_region
      %112 = dma.done [#allocation9], 4096
    $region61: #{tpu_custom_call.1} parent=1 // pred_fallthru
      _
    // Predicated region
    $region62: #{tpu_custom_call.1} parent=1 // pred_check
      _
    $region63: #{tpu_custom_call.1} parent=1 // pred_check_branch
      %114 = sbr.rel (0) target = $region65
    $region64: #{tpu_custom_call.1} parent=1 // pred_region
      %115 = dma.done [#allocation9], 2048
    $region65: #{tpu_custom_call.1} parent=1 // pred_fallthru
      _
    // Predicated region
    $region66: #{tpu_custom_call.1} parent=1 // pred_check
      _
    $region67: #{tpu_custom_call.1} parent=1 // pred_check_branch
      %117 = sbr.rel (0) target = $region69
    $region68: #{tpu_custom_call.1} parent=1 // pred_region
      %118 = dma.done [#allocation12], 1024
    $region69: #{tpu_custom_call.1} parent=1 // pred_fallthru
      _
    %v122 = vld [vmem:[#allocation2] sm:$0xf]
    %v123 = vld [vmem:[#allocation5] sm:$0xff]
    %v124 = vld [vmem:[#allocation5 + $0x8] sm:$0xff]
    %v125 = vld [vmem:[#allocation5 + $0x10] sm:$0xff]
    %v126 = vld [vmem:[#allocation5 + $0x18] sm:$0xff]
    %v127 = vld [vmem:[#allocation5 + $0x20] sm:$0xff]
    %v128 = vld [vmem:[#allocation5 + $0x28] sm:$0xff]
    %v129 = vld [vmem:[#allocation5 + $0x30] sm:$0xff]
    %v130 = vld [vmem:[#allocation5 + $0x38] sm:$0xff]
    %v131 = vld [vmem:[#allocation5 + $0x40] sm:$0xff]
    %v132 = vld [vmem:[#allocation5 + $0x48] sm:$0xff]
    %v133 = vld [vmem:[#allocation5 + $0x50] sm:$0xff]
    %v134 = vld [vmem:[#allocation5 + $0x58] sm:$0xff]
    %v135 = vld [vmem:[#allocation5 + $0x60] sm:$0xff]
    %v136 = vld [vmem:[#allocation5 + $0x68] sm:$0xff]
    %v137 = vld [vmem:[#allocation5 + $0x70] sm:$0xff]
    %v138 = vld [vmem:[#allocation5 + $0x78] sm:$0xff]
    %v139 = vld [vmem:[#allocation5 + $0x80] sm:$0xff]
    %v140 = vld [vmem:[#allocation5 + $0x88] sm:$0xff]
    %v141 = vld [vmem:[#allocation5 + $0x90] sm:$0xff]
    %v142 = vld [vmem:[#allocation5 + $0x98] sm:$0xff]
    %v143 = vld [vmem:[#allocation5 + $0xa0] sm:$0xff]
    %v144 = vld [vmem:[#allocation5 + $0xa8] sm:$0xff]
    %v145 = vld [vmem:[#allocation5 + $0xb0] sm:$0xff]
    %v146 = vld [vmem:[#allocation5 + $0xb8] sm:$0xff]
    %v147 = vld [vmem:[#allocation5 + $0xc0] sm:$0xff]
    %v148 = vld [vmem:[#allocation5 + $0xc8] sm:$0xff]
    %v149 = vld [vmem:[#allocation5 + $0xd0] sm:$0xff]
    %v150 = vld [vmem:[#allocation5 + $0xd8] sm:$0xff]
    %v151 = vld [vmem:[#allocation5 + $0xe0] sm:$0xff]
    %v152 = vld [vmem:[#allocation5 + $0xe8] sm:$0xff]
    %v153 = vld [vmem:[#allocation5 + $0xf0] sm:$0xff]
    %v154 = vld [vmem:[#allocation5 + $0xf8] sm:$0xff]
    %v155 = vld [vmem:[#allocation5 + $0x100] sm:$0xff]
    %v156 = vld [vmem:[#allocation5 + $0x108] sm:$0xff]
    %v157 = vld [vmem:[#allocation5 + $0x110] sm:$0xff]
    %v158 = vld [vmem:[#allocation5 + $0x118] sm:$0xff]
    %v159 = vld [vmem:[#allocation5 + $0x120] sm:$0xff]
    %v160 = vld [vmem:[#allocation5 + $0x128] sm:$0xff]
    %v161 = vld [vmem:[#allocation5 + $0x130] sm:$0xff]
    %v162 = vld [vmem:[#allocation5 + $0x138] sm:$0xff]
    %v163 = vld [vmem:[#allocation5 + $0x140] sm:$0xff]
    %v164 = vld [vmem:[#allocation5 + $0x148] sm:$0xff]
    %v165 = vld [vmem:[#allocation5 + $0x150] sm:$0xff]
    %v166 = vld [vmem:[#allocation5 + $0x158] sm:$0xff]
    %v167 = vld [vmem:[#allocation5 + $0x160] sm:$0xff]
    %v168 = vld [vmem:[#allocation5 + $0x168] sm:$0xff]
    %v169 = vld [vmem:[#allocation5 + $0x170] sm:$0xff]
    %v170 = vld [vmem:[#allocation5 + $0x178] sm:$0xff]
    %v171 = vld [vmem:[%s2] sm:$0x3f]
    %v173 = vlaneseq
    %v174 = vshrl.u32 %v173, 7
    %v175 = vsub.s32 0, %v174
    %v176 = vrot.slane %v171, %v175
    %v177 = vlaneseq
    %v178 = vshrl.u32 %v177, 7
    %v179 = vsub.s32 1, %v178
    %v180 = vrot.slane %v171, %v179
    %v181 = vlaneseq
    %v182 = vshrl.u32 %v181, 7
    %v183 = vsub.s32 2, %v182
    %v184 = vrot.slane %v171, %v183
    %v185 = vlaneseq
    %v186 = vshrl.u32 %v185, 7
    %v187 = vsub.s32 3, %v186
    %v188 = vrot.slane %v171, %v187
    %v189 = vlaneseq
    %v190 = vshrl.u32 %v189, 7
    %v191 = vsub.s32 4, %v190
    %v192 = vrot.slane %v171, %v191
    %v193 = vlaneseq
    %v194 = vshrl.u32 %v193, 7
    %v195 = vsub.s32 5, %v194
    %v196 = vrot.slane %v171, %v195
    %v251 = vunpack.c.l.b16 %v123
    %v252 = vunpack.c.h.b16 %v123
    %v253 = vunpack.c.l.b16 %v124
    %v254 = vunpack.c.h.b16 %v124
    %v255 = vunpack.c.l.b16 %v125
    %v256 = vunpack.c.h.b16 %v125
    %v257 = vunpack.c.l.b16 %v126
    %v258 = vunpack.c.h.b16 %v126
    %v259 = vunpack.c.l.b16 %v127
    %v260 = vunpack.c.h.b16 %v127
    %v261 = vunpack.c.l.b16 %v128
    %v262 = vunpack.c.h.b16 %v128
    %v263 = vunpack.c.l.b16 %v129
    %v264 = vunpack.c.h.b16 %v129
    %v265 = vunpack.c.l.b16 %v130
    %v266 = vunpack.c.h.b16 %v130
    %v267 = vunpack.c.l.b16 %v131
    %v268 = vunpack.c.h.b16 %v131
    %v269 = vunpack.c.l.b16 %v132
    %v270 = vunpack.c.h.b16 %v132
    %v271 = vunpack.c.l.b16 %v133
    %v272 = vunpack.c.h.b16 %v133
    %v273 = vunpack.c.l.b16 %v134
    %v274 = vunpack.c.h.b16 %v134
    %v275 = vunpack.c.l.b16 %v135
    %v276 = vunpack.c.h.b16 %v135
    %v277 = vunpack.c.l.b16 %v136
    %v278 = vunpack.c.h.b16 %v136
    %v279 = vunpack.c.l.b16 %v137
    %v280 = vunpack.c.h.b16 %v137
    %v281 = vunpack.c.l.b16 %v138
    %v282 = vunpack.c.h.b16 %v138
    %v283 = vunpack.c.l.b16 %v139
    %v284 = vunpack.c.h.b16 %v139
    %v285 = vunpack.c.l.b16 %v140
    %v286 = vunpack.c.h.b16 %v140
    %v287 = vunpack.c.l.b16 %v141
    %v288 = vunpack.c.h.b16 %v141
    %v289 = vunpack.c.l.b16 %v142
    %v290 = vunpack.c.h.b16 %v142
    %v291 = vunpack.c.l.b16 %v143
    %v292 = vunpack.c.h.b16 %v143
    %v293 = vunpack.c.l.b16 %v144
    %v294 = vunpack.c.h.b16 %v144
    %v295 = vunpack.c.l.b16 %v145
    %v296 = vunpack.c.h.b16 %v145
    %v297 = vunpack.c.l.b16 %v146
    %v298 = vunpack.c.h.b16 %v146
    %v299 = vunpack.c.l.b16 %v147
    %v300 = vunpack.c.h.b16 %v147
    %v301 = vunpack.c.l.b16 %v148
    %v302 = vunpack.c.h.b16 %v148
    %v303 = vunpack.c.l.b16 %v149
    %v304 = vunpack.c.h.b16 %v149
    %v305 = vunpack.c.l.b16 %v150
    %v306 = vunpack.c.h.b16 %v150
    %v307 = vunpack.c.l.b16 %v151
    %v308 = vunpack.c.h.b16 %v151
    %v309 = vunpack.c.l.b16 %v152
    %v310 = vunpack.c.h.b16 %v152
    %v311 = vunpack.c.l.b16 %v153
    %v312 = vunpack.c.h.b16 %v153
    %v313 = vunpack.c.l.b16 %v154
    %v314 = vunpack.c.h.b16 %v154
    %v315 = vunpack.c.l.b16 %v155
    %v316 = vunpack.c.h.b16 %v155
    %v317 = vunpack.c.l.b16 %v156
    %v318 = vunpack.c.h.b16 %v156
    %v319 = vunpack.c.l.b16 %v157
    %v320 = vunpack.c.h.b16 %v157
    %v321 = vunpack.c.l.b16 %v158
    %v322 = vunpack.c.h.b16 %v158
    %v323 = vunpack.c.l.b16 %v159
    %v324 = vunpack.c.h.b16 %v159
    %v325 = vunpack.c.l.b16 %v160
    %v326 = vunpack.c.h.b16 %v160
    %v327 = vunpack.c.l.b16 %v161
    %v328 = vunpack.c.h.b16 %v161
    %v329 = vunpack.c.l.b16 %v162
    %v330 = vunpack.c.h.b16 %v162
    %v331 = vunpack.c.l.b16 %v163
    %v332 = vunpack.c.h.b16 %v163
    %v333 = vunpack.c.l.b16 %v164
    %v334 = vunpack.c.h.b16 %v164
    %v335 = vunpack.c.l.b16 %v165
    %v336 = vunpack.c.h.b16 %v165
    %v337 = vunpack.c.l.b16 %v166
    %v338 = vunpack.c.h.b16 %v166
    %v339 = vunpack.c.l.b16 %v167
    %v340 = vunpack.c.h.b16 %v167
    %v341 = vunpack.c.l.b16 %v168
    %v342 = vunpack.c.h.b16 %v168
    %v343 = vunpack.c.l.b16 %v169
    %v344 = vunpack.c.h.b16 %v169
    %v345 = vunpack.c.l.b16 %v170
    %v346 = vunpack.c.h.b16 %v170
    %v347 = vpack.c.b16 %v257, %v251
    %v348 = vpack.c.b16 %v258, %v252
    %v349 = vpack.c.b16 %v259, %v253
    %v350 = vpack.c.b16 %v260, %v254
    %v351 = vpack.c.b16 %v261, %v255
    %v352 = vpack.c.b16 %v262, %v256
    %v353 = vpack.c.b16 %v269, %v263
    %v354 = vpack.c.b16 %v270, %v264
    %v355 = vpack.c.b16 %v271, %v265
    %v356 = vpack.c.b16 %v272, %v266
    %v357 = vpack.c.b16 %v273, %v267
    %v358 = vpack.c.b16 %v274, %v268
    %v359 = vpack.c.b16 %v281, %v275
    %v360 = vpack.c.b16 %v282, %v276
    %v361 = vpack.c.b16 %v283, %v277
    %v362 = vpack.c.b16 %v284, %v278
    %v363 = vpack.c.b16 %v285, %v279
    %v364 = vpack.c.b16 %v286, %v280
    %v365 = vpack.c.b16 %v293, %v287
    %v366 = vpack.c.b16 %v294, %v288
    %v367 = vpack.c.b16 %v295, %v289
    %v368 = vpack.c.b16 %v296, %v290
    %v369 = vpack.c.b16 %v297, %v291
    %v370 = vpack.c.b16 %v298, %v292
    %v371 = vpack.c.b16 %v305, %v299
    %v372 = vpack.c.b16 %v306, %v300
    %v373 = vpack.c.b16 %v307, %v301
    %v374 = vpack.c.b16 %v308, %v302
    %v375 = vpack.c.b16 %v309, %v303
    %v376 = vpack.c.b16 %v310, %v304
    %v377 = vpack.c.b16 %v317, %v311
    %v378 = vpack.c.b16 %v318, %v312
    %v379 = vpack.c.b16 %v319, %v313
    %v380 = vpack.c.b16 %v320, %v314
    %v381 = vpack.c.b16 %v321, %v315
    %v382 = vpack.c.b16 %v322, %v316
    %v383 = vpack.c.b16 %v329, %v323
    %v384 = vpack.c.b16 %v330, %v324
    %v385 = vpack.c.b16 %v331, %v325
    %v386 = vpack.c.b16 %v332, %v326
    %v387 = vpack.c.b16 %v333, %v327
    %v388 = vpack.c.b16 %v334, %v328
    %v389 = vpack.c.b16 %v341, %v335
    %v390 = vpack.c.b16 %v342, %v336
    %v391 = vpack.c.b16 %v343, %v337
    %v392 = vpack.c.b16 %v344, %v338
    %v393 = vpack.c.b16 %v345, %v339
    %v394 = vpack.c.b16 %v346, %v340
    %443 = vmatprep.subr.bf16.mxu0 %v348
    %444 = vmatpush1.bf16.msra.mxu0 %v347
    %445 = vmatprep.subr.bf16.mxu0 %v354
    %446 = vmatpush1.bf16.msra.mxu0 %v353
    %447 = vmatprep.subr.bf16.mxu0 %v360
    %448 = vmatpush1.bf16.msra.mxu0 %v359
    %449 = vmatprep.subr.bf16.mxu0 %v366
    %450 = vmatpush1.bf16.msra.mxu0 %v365
    %451 = vmatprep.subr.bf16.mxu0 %v372
    %452 = vmatpush1.bf16.msra.mxu0 %v371
    %453 = vmatprep.subr.bf16.mxu0 %v378
    %454 = vmatpush1.bf16.msra.mxu0 %v377
    %455 = vmatprep.subr.bf16.mxu0 %v384
    %456 = vmatpush1.bf16.msra.mxu0 %v383
    %457 = vmatprep.subr.bf16.mxu0 %v390
    %458 = vmatpush1.bf16.msra.mxu0 %v389
    %459 = vmatprep.subr.bf16.mxu0 0
    %460 = vmatpush1.bf16.msra.mxu0 0
    %461 = vmatprep.subr.bf16.mxu0 0
    %462 = vmatpush1.bf16.msra.mxu0 0
    %463 = vmatprep.subr.bf16.mxu0 0
    %464 = vmatpush1.bf16.msra.mxu0 0
    %465 = vmatprep.subr.bf16.mxu0 0
    %466 = vmatpush1.bf16.msra.mxu0 0
    %467 = vmatprep.subr.bf16.mxu0 0
    %468 = vmatpush1.bf16.msra.mxu0 0
    %469 = vmatprep.subr.bf16.mxu0 0
    %470 = vmatpush1.bf16.msra.mxu0 0
    %471 = vmatprep.subr.bf16.mxu0 0
    %472 = vmatpush1.bf16.msra.mxu0 0
    %473 = vmatprep.subr.bf16.mxu0 0
    %474 = vmatpush1.bf16.msra.mxu0 0
    %475 = vmatprep.mubr.bf16.mxu0 0
    %476 = vmatmul.mubr.bf16.gmra.mrb[0].mxu0 %v122
    %v477 = vpop.f32.mrb[0].mxu0
    %v478 = vadd.f32 %v176, %v477
    %v479 = vpop.f32.mrb[0].mxu0
    %v480 = vadd.f32 %v180, %v479
    %v481 = vpop.f32.mrb[0].mxu0
    %v482 = vpop.f32.mrb[0].mxu0
    %483 = vdwg.mxu0
    %484 = vmatprep.subr.bf16.mxu0 %v350
    %485 = vmatpush1.bf16.msra.mxu0 %v349
    %486 = vmatprep.subr.bf16.mxu0 %v356
    %487 = vmatpush1.bf16.msra.mxu0 %v355
    %488 = vmatprep.subr.bf16.mxu0 %v362
    %489 = vmatpush1.bf16.msra.mxu0 %v361
    %490 = vmatprep.subr.bf16.mxu0 %v368
    %491 = vmatpush1.bf16.msra.mxu0 %v367
    %492 = vmatprep.subr.bf16.mxu0 %v374
    %493 = vmatpush1.bf16.msra.mxu0 %v373
    %494 = vmatprep.subr.bf16.mxu0 %v380
    %495 = vmatpush1.bf16.msra.mxu0 %v379
    %496 = vmatprep.subr.bf16.mxu0 %v386
    %497 = vmatpush1.bf16.msra.mxu0 %v385
    %498 = vmatprep.subr.bf16.mxu0 %v392
    %499 = vmatpush1.bf16.msra.mxu0 %v391
    %500 = vmatprep.subr.bf16.mxu0 0
    %501 = vmatpush1.bf16.msra.mxu0 0
    %502 = vmatprep.subr.bf16.mxu0 0
    %503 = vmatpush1.bf16.msra.mxu0 0
    %504 = vmatprep.subr.bf16.mxu0 0
    %505 = vmatpush1.bf16.msra.mxu0 0
    %506 = vmatprep.subr.bf16.mxu0 0
    %507 = vmatpush1.bf16.msra.mxu0 0
    %508 = vmatprep.subr.bf16.mxu0 0
    %509 = vmatpush1.bf16.msra.mxu0 0
    %510 = vmatprep.subr.bf16.mxu0 0
    %511 = vmatpush1.bf16.msra.mxu0 0
    %512 = vmatprep.subr.bf16.mxu0 0
    %513 = vmatpush1.bf16.msra.mxu0 0
    %514 = vmatprep.subr.bf16.mxu0 0
    %515 = vmatpush1.bf16.msra.mxu0 0
    %516 = vmatprep.mubr.bf16.mxu0 0
    %517 = vmatmul.mubr.bf16.gmra.mrb[0].mxu0 %v122
    %v518 = vpop.f32.mrb[0].mxu0
    %v519 = vadd.f32 %v184, %v518
    %v520 = vpop.f32.mrb[0].mxu0
    %v521 = vadd.f32 %v188, %v520
    %v522 = vpop.f32.mrb[0].mxu0
    %v523 = vpop.f32.mrb[0].mxu0
    %524 = vdwg.mxu0
    %525 = vmatprep.subr.bf16.mxu0 %v352
    %526 = vmatpush1.bf16.msra.mxu0 %v351
    %527 = vmatprep.subr.bf16.mxu0 %v358
    %528 = vmatpush1.bf16.msra.mxu0 %v357
    %529 = vmatprep.subr.bf16.mxu0 %v364
    %530 = vmatpush1.bf16.msra.mxu0 %v363
    %531 = vmatprep.subr.bf16.mxu0 %v370
    %532 = vmatpush1.bf16.msra.mxu0 %v369
    %533 = vmatprep.subr.bf16.mxu0 %v376
    %534 = vmatpush1.bf16.msra.mxu0 %v375
    %535 = vmatprep.subr.bf16.mxu0 %v382
    %536 = vmatpush1.bf16.msra.mxu0 %v381
    %537 = vmatprep.subr.bf16.mxu0 %v388
    %538 = vmatpush1.bf16.msra.mxu0 %v387
    %539 = vmatprep.subr.bf16.mxu0 %v394
    %540 = vmatpush1.bf16.msra.mxu0 %v393
    %541 = vmatprep.subr.bf16.mxu0 0
    %542 = vmatpush1.bf16.msra.mxu0 0
    %543 = vmatprep.subr.bf16.mxu0 0
    %544 = vmatpush1.bf16.msra.mxu0 0
    %545 = vmatprep.subr.bf16.mxu0 0
    %546 = vmatpush1.bf16.msra.mxu0 0
    %547 = vmatprep.subr.bf16.mxu0 0
    %548 = vmatpush1.bf16.msra.mxu0 0
    %549 = vmatprep.subr.bf16.mxu0 0
    %550 = vmatpush1.bf16.msra.mxu0 0
    %551 = vmatprep.subr.bf16.mxu0 0
    %552 = vmatpush1.bf16.msra.mxu0 0
    %553 = vmatprep.subr.bf16.mxu0 0
    %554 = vmatpush1.bf16.msra.mxu0 0
    %555 = vmatprep.subr.bf16.mxu0 0
    %556 = vmatpush1.bf16.msra.mxu0 0
    %557 = vmatprep.mubr.bf16.mxu0 0
    %558 = vmatmul.mubr.bf16.gmra.mrb[0].mxu0 %v122
    %v559 = vpop.f32.mrb[0].mxu0
    %v560 = vadd.f32 %v192, %v559
    %v561 = vpop.f32.mrb[0].mxu0
    %v562 = vadd.f32 %v196, %v561
    %v563 = vpop.f32.mrb[0].mxu0
    %v564 = vpop.f32.mrb[0].mxu0
    %565 = vdwg.mxu0
    %v566 = vpack.c.bf16 %v478, %v478
    %v567 = vpack.c.bf16 %v480, %v480
    %v568 = vpack.c.bf16 %v519, %v519
    %v569 = vpack.c.bf16 %v521, %v521
    %v570 = vpack.c.bf16 %v560, %v560
    %v571 = vpack.c.bf16 %v562, %v562
    %v572 = vmul.bf16 %v566, 1056980736
    %v573 = vmul.bf16 %v567, 1056980736
    %v574 = vtanh.bf16.pop %v572
    %v575 = vtanh.bf16.pop %v573
    %v576 = vadd.bf16 %v574, 1065369472
    %v577 = vadd.bf16 %v575, 1065369472
    %v578 = vmul.bf16 %v576, 1056980736
    %v579 = vmul.bf16 %v577, 1056980736
    %v580 = vtanh.bf16.pop %v568
    %v581 = vtanh.bf16.pop %v569
    %v582 = vmul.bf16 %v570, 1056980736
    %v583 = vmul.bf16 %v571, 1056980736
    %v584 = vtanh.bf16.pop %v582
    %v585 = vtanh.bf16.pop %v583
    %v586 = vadd.bf16 %v584, 1065369472
    %v587 = vadd.bf16 %v585, 1065369472
    %v588 = vmul.bf16 %v586, 1056980736
    %v589 = vmul.bf16 %v587, 1056980736
    %v590 = vmul.bf16 %v578, %v580
    %v591 = vmul.bf16 %v579, %v581
    %v592 = vtanh.bf16.pop %v590
    %v593 = vtanh.bf16.pop %v591
    %v594 = vmul.bf16 %v588, %v592
    %v595 = vmul.bf16 %v589, %v593
    %v596 = vld [vmem:[#allocation7] sm:$0xff]
    %v597 = vld [vmem:[#allocation7 + $0x8] sm:$0xff]
    %v598 = vld [vmem:[#allocation7 + $0x10] sm:$0xff]
    %v599 = vld [vmem:[#allocation7 + $0x18] sm:$0xff]
    %v600 = vld [vmem:[#allocation7 + $0x20] sm:$0xff]
    %v601 = vld [vmem:[#allocation7 + $0x28] sm:$0xff]
    %v602 = vld [vmem:[#allocation7 + $0x30] sm:$0xff]
    %v603 = vld [vmem:[#allocation7 + $0x38] sm:$0xff]
    %v604 = vld [vmem:[#allocation7 + $0x40] sm:$0xff]
    %v605 = vld [vmem:[#allocation7 + $0x48] sm:$0xff]
    %v606 = vld [vmem:[#allocation7 + $0x50] sm:$0xff]
    %v607 = vld [vmem:[#allocation7 + $0x58] sm:$0xff]
    %v608 = vld [vmem:[#allocation7 + $0x60] sm:$0xff]
    %v609 = vld [vmem:[#allocation7 + $0x68] sm:$0xff]
    %v610 = vld [vmem:[#allocation7 + $0x70] sm:$0xff]
    %v611 = vld [vmem:[#allocation7 + $0x78] sm:$0xff]
    %v612 = vld [vmem:[#allocation7 + $0x80] sm:$0xff]
    %v613 = vld [vmem:[#allocation7 + $0x88] sm:$0xff]
    %v614 = vld [vmem:[#allocation7 + $0x90] sm:$0xff]
    %v615 = vld [vmem:[#allocation7 + $0x98] sm:$0xff]
    %v616 = vld [vmem:[#allocation7 + $0xa0] sm:$0xff]
    %v617 = vld [vmem:[#allocation7 + $0xa8] sm:$0xff]
    %v618 = vld [vmem:[#allocation7 + $0xb0] sm:$0xff]
    %v619 = vld [vmem:[#allocation7 + $0xb8] sm:$0xff]
    %v620 = vld [vmem:[#allocation7 + $0xc0] sm:$0xff]
    %v621 = vld [vmem:[#allocation7 + $0xc8] sm:$0xff]
    %v622 = vld [vmem:[#allocation7 + $0xd0] sm:$0xff]
    %v623 = vld [vmem:[#allocation7 + $0xd8] sm:$0xff]
    %v624 = vld [vmem:[#allocation7 + $0xe0] sm:$0xff]
    %v625 = vld [vmem:[#allocation7 + $0xe8] sm:$0xff]
    %v626 = vld [vmem:[#allocation7 + $0xf0] sm:$0xff]
    %v627 = vld [vmem:[#allocation7 + $0xf8] sm:$0xff]
    %v628 = vld [vmem:[#allocation7 + $0x100] sm:$0xff]
    %v629 = vld [vmem:[#allocation7 + $0x108] sm:$0xff]
    %v630 = vld [vmem:[#allocation7 + $0x110] sm:$0xff]
    %v631 = vld [vmem:[#allocation7 + $0x118] sm:$0xff]
    %v632 = vld [vmem:[#allocation7 + $0x120] sm:$0xff]
    %v633 = vld [vmem:[#allocation7 + $0x128] sm:$0xff]
    %v634 = vld [vmem:[#allocation7 + $0x130] sm:$0xff]
    %v635 = vld [vmem:[#allocation7 + $0x138] sm:$0xff]
    %v636 = vld [vmem:[#allocation7 + $0x140] sm:$0xff]
    %v637 = vld [vmem:[#allocation7 + $0x148] sm:$0xff]
    %v638 = vld [vmem:[#allocation7 + $0x150] sm:$0xff]
    %v639 = vld [vmem:[#allocation7 + $0x158] sm:$0xff]
    %v640 = vld [vmem:[#allocation7 + $0x160] sm:$0xff]
    %v641 = vld [vmem:[#allocation7 + $0x168] sm:$0xff]
    %v642 = vld [vmem:[#allocation7 + $0x170] sm:$0xff]
    %v643 = vld [vmem:[#allocation7 + $0x178] sm:$0xff]
    %v644 = vld [vmem:[#allocation7 + $0x180] sm:$0xff]
    %v645 = vld [vmem:[#allocation7 + $0x188] sm:$0xff]
    %v646 = vld [vmem:[#allocation7 + $0x190] sm:$0xff]
    %v647 = vld [vmem:[#allocation7 + $0x198] sm:$0xff]
    %v648 = vld [vmem:[#allocation7 + $0x1a0] sm:$0xff]
    %v649 = vld [vmem:[#allocation7 + $0x1a8] sm:$0xff]
    %v650 = vld [vmem:[#allocation7 + $0x1b0] sm:$0xff]
    %v651 = vld [vmem:[#allocation7 + $0x1b8] sm:$0xff]
    %v652 = vld [vmem:[#allocation7 + $0x1c0] sm:$0xff]
    %v653 = vld [vmem:[#allocation7 + $0x1c8] sm:$0xff]
    %v654 = vld [vmem:[#allocation7 + $0x1d0] sm:$0xff]
    %v655 = vld [vmem:[#allocation7 + $0x1d8] sm:$0xff]
    %v656 = vld [vmem:[#allocation7 + $0x1e0] sm:$0xff]
    %v657 = vld [vmem:[#allocation7 + $0x1e8] sm:$0xff]
    %v658 = vld [vmem:[#allocation7 + $0x1f0] sm:$0xff]
    %v659 = vld [vmem:[#allocation7 + $0x1f8] sm:$0xff]
    %v660 = vld [vmem:[#allocation7 + $0x200] sm:$0xff]
    %v661 = vld [vmem:[#allocation7 + $0x208] sm:$0xff]
    %v662 = vld [vmem:[#allocation7 + $0x210] sm:$0xff]
    %v663 = vld [vmem:[#allocation7 + $0x218] sm:$0xff]
    %v664 = vld [vmem:[#allocation7 + $0x220] sm:$0xff]
    %v665 = vld [vmem:[#allocation7 + $0x228] sm:$0xff]
    %v666 = vld [vmem:[#allocation7 + $0x230] sm:$0xff]
    %v667 = vld [vmem:[#allocation7 + $0x238] sm:$0xff]
    %v668 = vld [vmem:[#allocation7 + $0x240] sm:$0xff]
    %v669 = vld [vmem:[#allocation7 + $0x248] sm:$0xff]
    %v670 = vld [vmem:[#allocation7 + $0x250] sm:$0xff]
    %v671 = vld [vmem:[#allocation7 + $0x258] sm:$0xff]
    %v672 = vld [vmem:[#allocation7 + $0x260] sm:$0xff]
    %v673 = vld [vmem:[#allocation7 + $0x268] sm:$0xff]
    %v674 = vld [vmem:[#allocation7 + $0x270] sm:$0xff]
    %v675 = vld [vmem:[#allocation7 + $0x278] sm:$0xff]
    %v676 = vld [vmem:[#allocation7 + $0x280] sm:$0xff]
    %v677 = vld [vmem:[#allocation7 + $0x288] sm:$0xff]
    %v678 = vld [vmem:[#allocation7 + $0x290] sm:$0xff]
    %v679 = vld [vmem:[#allocation7 + $0x298] sm:$0xff]
    %v680 = vld [vmem:[#allocation7 + $0x2a0] sm:$0xff]
    %v681 = vld [vmem:[#allocation7 + $0x2a8] sm:$0xff]
    %v682 = vld [vmem:[#allocation7 + $0x2b0] sm:$0xff]
    %v683 = vld [vmem:[#allocation7 + $0x2b8] sm:$0xff]
    %v684 = vld [vmem:[#allocation7 + $0x2c0] sm:$0xff]
    %v685 = vld [vmem:[#allocation7 + $0x2c8] sm:$0xff]
    %v686 = vld [vmem:[#allocation7 + $0x2d0] sm:$0xff]
    %v687 = vld [vmem:[#allocation7 + $0x2d8] sm:$0xff]
    %v688 = vld [vmem:[#allocation7 + $0x2e0] sm:$0xff]
    %v689 = vld [vmem:[#allocation7 + $0x2e8] sm:$0xff]
    %v690 = vld [vmem:[#allocation7 + $0x2f0] sm:$0xff]
    %v691 = vld [vmem:[#allocation7 + $0x2f8] sm:$0xff]
    %v692 = vld [vmem:[%s4] sm:$0x3f]
    %v694 = vlaneseq
    %v695 = vshrl.u32 %v694, 7
    %v696 = vsub.s32 0, %v695
    %v697 = vrot.slane %v692, %v696
    %v698 = vlaneseq
    %v699 = vshrl.u32 %v698, 7
    %v700 = vsub.s32 1, %v699
    %v701 = vrot.slane %v692, %v700
    %v702 = vlaneseq
    %v703 = vshrl.u32 %v702, 7
    %v704 = vsub.s32 2, %v703
    %v705 = vrot.slane %v692, %v704
    %v706 = vlaneseq
    %v707 = vshrl.u32 %v706, 7
    %v708 = vsub.s32 3, %v707
    %v709 = vrot.slane %v692, %v708
    %v710 = vlaneseq
    %v711 = vshrl.u32 %v710, 7
    %v712 = vsub.s32 4, %v711
    %v713 = vrot.slane %v692, %v712
    %v714 = vlaneseq
    %v715 = vshrl.u32 %v714, 7
    %v716 = vsub.s32 5, %v715
    %v717 = vrot.slane %v692, %v716
    %v820 = vunpack.c.l.b16 %v596
    %v821 = vunpack.c.h.b16 %v596
    %v822 = vunpack.c.l.b16 %v597
    %v823 = vunpack.c.h.b16 %v597
    %v824 = vunpack.c.l.b16 %v598
    %v825 = vunpack.c.h.b16 %v598
    %v826 = vunpack.c.l.b16 %v599
    %v827 = vunpack.c.h.b16 %v599
    %v828 = vunpack.c.l.b16 %v600
    %v829 = vunpack.c.h.b16 %v600
    %v830 = vunpack.c.l.b16 %v601
    %v831 = vunpack.c.h.b16 %v601
    %v832 = vunpack.c.l.b16 %v602
    %v833 = vunpack.c.h.b16 %v602
    %v834 = vunpack.c.l.b16 %v603
    %v835 = vunpack.c.h.b16 %v603
    %v836 = vunpack.c.l.b16 %v604
    %v837 = vunpack.c.h.b16 %v604
    %v838 = vunpack.c.l.b16 %v605
    %v839 = vunpack.c.h.b16 %v605
    %v840 = vunpack.c.l.b16 %v606
    %v841 = vunpack.c.h.b16 %v606
    %v842 = vunpack.c.l.b16 %v607
    %v843 = vunpack.c.h.b16 %v607
    %v844 = vunpack.c.l.b16 %v608
    %v845 = vunpack.c.h.b16 %v608
    %v846 = vunpack.c.l.b16 %v609
    %v847 = vunpack.c.h.b16 %v609
    %v848 = vunpack.c.l.b16 %v610
    %v849 = vunpack.c.h.b16 %v610
    %v850 = vunpack.c.l.b16 %v611
    %v851 = vunpack.c.h.b16 %v611
    %v852 = vunpack.c.l.b16 %v612
    %v853 = vunpack.c.h.b16 %v612
    %v854 = vunpack.c.l.b16 %v613
    %v855 = vunpack.c.h.b16 %v613
    %v856 = vunpack.c.l.b16 %v614
    %v857 = vunpack.c.h.b16 %v614
    %v858 = vunpack.c.l.b16 %v615
    %v859 = vunpack.c.h.b16 %v615
    %v860 = vunpack.c.l.b16 %v616
    %v861 = vunpack.c.h.b16 %v616
    %v862 = vunpack.c.l.b16 %v617
    %v863 = vunpack.c.h.b16 %v617
    %v864 = vunpack.c.l.b16 %v618
    %v865 = vunpack.c.h.b16 %v618
    %v866 = vunpack.c.l.b16 %v619
    %v867 = vunpack.c.h.b16 %v619
    %v868 = vunpack.c.l.b16 %v620
    %v869 = vunpack.c.h.b16 %v620
    %v870 = vunpack.c.l.b16 %v621
    %v871 = vunpack.c.h.b16 %v621
    %v872 = vunpack.c.l.b16 %v622
    %v873 = vunpack.c.h.b16 %v622
    %v874 = vunpack.c.l.b16 %v623
    %v875 = vunpack.c.h.b16 %v623
    %v876 = vunpack.c.l.b16 %v624
    %v877 = vunpack.c.h.b16 %v624
    %v878 = vunpack.c.l.b16 %v625
    %v879 = vunpack.c.h.b16 %v625
    %v880 = vunpack.c.l.b16 %v626
    %v881 = vunpack.c.h.b16 %v626
    %v882 = vunpack.c.l.b16 %v627
    %v883 = vunpack.c.h.b16 %v627
    %v884 = vunpack.c.l.b16 %v628
    %v885 = vunpack.c.h.b16 %v628
    %v886 = vunpack.c.l.b16 %v629
    %v887 = vunpack.c.h.b16 %v629
    %v888 = vunpack.c.l.b16 %v630
    %v889 = vunpack.c.h.b16 %v630
    %v890 = vunpack.c.l.b16 %v631
    %v891 = vunpack.c.h.b16 %v631
    %v892 = vunpack.c.l.b16 %v632
    %v893 = vunpack.c.h.b16 %v632
    %v894 = vunpack.c.l.b16 %v633
    %v895 = vunpack.c.h.b16 %v633
    %v896 = vunpack.c.l.b16 %v634
    %v897 = vunpack.c.h.b16 %v634
    %v898 = vunpack.c.l.b16 %v635
    %v899 = vunpack.c.h.b16 %v635
    %v900 = vunpack.c.l.b16 %v636
    %v901 = vunpack.c.h.b16 %v636
    %v902 = vunpack.c.l.b16 %v637
    %v903 = vunpack.c.h.b16 %v637
    %v904 = vunpack.c.l.b16 %v638
    %v905 = vunpack.c.h.b16 %v638
    %v906 = vunpack.c.l.b16 %v639
    %v907 = vunpack.c.h.b16 %v639
    %v908 = vunpack.c.l.b16 %v640
    %v909 = vunpack.c.h.b16 %v640
    %v910 = vunpack.c.l.b16 %v641
    %v911 = vunpack.c.h.b16 %v641
    %v912 = vunpack.c.l.b16 %v642
    %v913 = vunpack.c.h.b16 %v642
    %v914 = vunpack.c.l.b16 %v643
    %v915 = vunpack.c.h.b16 %v643
    %v916 = vunpack.c.l.b16 %v644
    %v917 = vunpack.c.h.b16 %v644
    %v918 = vunpack.c.l.b16 %v645
    %v919 = vunpack.c.h.b16 %v645
    %v920 = vunpack.c.l.b16 %v646
    %v921 = vunpack.c.h.b16 %v646
    %v922 = vunpack.c.l.b16 %v647
    %v923 = vunpack.c.h.b16 %v647
    %v924 = vunpack.c.l.b16 %v648
    %v925 = vunpack.c.h.b16 %v648
    %v926 = vunpack.c.l.b16 %v649
    %v927 = vunpack.c.h.b16 %v649
    %v928 = vunpack.c.l.b16 %v650
    %v929 = vunpack.c.h.b16 %v650
    %v930 = vunpack.c.l.b16 %v651
    %v931 = vunpack.c.h.b16 %v651
    %v932 = vunpack.c.l.b16 %v652
    %v933 = vunpack.c.h.b16 %v652
    %v934 = vunpack.c.l.b16 %v653
    %v935 = vunpack.c.h.b16 %v653
    %v936 = vunpack.c.l.b16 %v654
    %v937 = vunpack.c.h.b16 %v654
    %v938 = vunpack.c.l.b16 %v655
    %v939 = vunpack.c.h.b16 %v655
    %v940 = vunpack.c.l.b16 %v656
    %v941 = vunpack.c.h.b16 %v656
    %v942 = vunpack.c.l.b16 %v657
    %v943 = vunpack.c.h.b16 %v657
    %v944 = vunpack.c.l.b16 %v658
    %v945 = vunpack.c.h.b16 %v658
    %v946 = vunpack.c.l.b16 %v659
    %v947 = vunpack.c.h.b16 %v659
    %v948 = vunpack.c.l.b16 %v660
    %v949 = vunpack.c.h.b16 %v660
    %v950 = vunpack.c.l.b16 %v661
    %v951 = vunpack.c.h.b16 %v661
    %v952 = vunpack.c.l.b16 %v662
    %v953 = vunpack.c.h.b16 %v662
    %v954 = vunpack.c.l.b16 %v663
    %v955 = vunpack.c.h.b16 %v663
    %v956 = vunpack.c.l.b16 %v664
    %v957 = vunpack.c.h.b16 %v664
    %v958 = vunpack.c.l.b16 %v665
    %v959 = vunpack.c.h.b16 %v665
    %v960 = vunpack.c.l.b16 %v666
    %v961 = vunpack.c.h.b16 %v666
    %v962 = vunpack.c.l.b16 %v667
    %v963 = vunpack.c.h.b16 %v667
    %v964 = vunpack.c.l.b16 %v668
    %v965 = vunpack.c.h.b16 %v668
    %v966 = vunpack.c.l.b16 %v669
    %v967 = vunpack.c.h.b16 %v669
    %v968 = vunpack.c.l.b16 %v670
    %v969 = vunpack.c.h.b16 %v670
    %v970 = vunpack.c.l.b16 %v671
    %v971 = vunpack.c.h.b16 %v671
    %v972 = vunpack.c.l.b16 %v672
    %v973 = vunpack.c.h.b16 %v672
    %v974 = vunpack.c.l.b16 %v673
    %v975 = vunpack.c.h.b16 %v673
    %v976 = vunpack.c.l.b16 %v674
    %v977 = vunpack.c.h.b16 %v674
    %v978 = vunpack.c.l.b16 %v675
    %v979 = vunpack.c.h.b16 %v675
    %v980 = vunpack.c.l.b16 %v676
    %v981 = vunpack.c.h.b16 %v676
    %v982 = vunpack.c.l.b16 %v677
    %v983 = vunpack.c.h.b16 %v677
    %v984 = vunpack.c.l.b16 %v678
    %v985 = vunpack.c.h.b16 %v678
    %v986 = vunpack.c.l.b16 %v679
    %v987 = vunpack.c.h.b16 %v679
    %v988 = vunpack.c.l.b16 %v680
    %v989 = vunpack.c.h.b16 %v680
    %v990 = vunpack.c.l.b16 %v681
    %v991 = vunpack.c.h.b16 %v681
    %v992 = vunpack.c.l.b16 %v682
    %v993 = vunpack.c.h.b16 %v682
    %v994 = vunpack.c.l.b16 %v683
    %v995 = vunpack.c.h.b16 %v683
    %v996 = vunpack.c.l.b16 %v684
    %v997 = vunpack.c.h.b16 %v684
    %v998 = vunpack.c.l.b16 %v685
    %v999 = vunpack.c.h.b16 %v685
    %v1000 = vunpack.c.l.b16 %v686
    %v1001 = vunpack.c.h.b16 %v686
    %v1002 = vunpack.c.l.b16 %v687
    %v1003 = vunpack.c.h.b16 %v687
    %v1004 = vunpack.c.l.b16 %v688
    %v1005 = vunpack.c.h.b16 %v688
    %v1006 = vunpack.c.l.b16 %v689
    %v1007 = vunpack.c.h.b16 %v689
    %v1008 = vunpack.c.l.b16 %v690
    %v1009 = vunpack.c.h.b16 %v690
    %v1010 = vunpack.c.l.b16 %v691
    %v1011 = vunpack.c.h.b16 %v691
    %v1012 = vpack.c.b16 %v826, %v820
    %v1013 = vpack.c.b16 %v827, %v821
    %v1014 = vpack.c.b16 %v828, %v822
    %v1015 = vpack.c.b16 %v829, %v823
    %v1016 = vpack.c.b16 %v830, %v824
    %v1017 = vpack.c.b16 %v831, %v825
    %v1018 = vpack.c.b16 %v838, %v832
    %v1019 = vpack.c.b16 %v839, %v833
    %v1020 = vpack.c.b16 %v840, %v834
    %v1021 = vpack.c.b16 %v841, %v835
    %v1022 = vpack.c.b16 %v842, %v836
    %v1023 = vpack.c.b16 %v843, %v837
    %v1024 = vpack.c.b16 %v850, %v844
    %v1025 = vpack.c.b16 %v851, %v845
    %v1026 = vpack.c.b16 %v852, %v846
    %v1027 = vpack.c.b16 %v853, %v847
    %v1028 = vpack.c.b16 %v854, %v848
    %v1029 = vpack.c.b16 %v855, %v849
    %v1030 = vpack.c.b16 %v862, %v856
    %v1031 = vpack.c.b16 %v863, %v857
    %v1032 = vpack.c.b16 %v864, %v858
    %v1033 = vpack.c.b16 %v865, %v859
    %v1034 = vpack.c.b16 %v866, %v860
    %v1035 = vpack.c.b16 %v867, %v861
    %v1036 = vpack.c.b16 %v874, %v868
    %v1037 = vpack.c.b16 %v875, %v869
    %v1038 = vpack.c.b16 %v876, %v870
    %v1039 = vpack.c.b16 %v877, %v871
    %v1040 = vpack.c.b16 %v878, %v872
    %v1041 = vpack.c.b16 %v879, %v873
    %v1042 = vpack.c.b16 %v886, %v880
    %v1043 = vpack.c.b16 %v887, %v881
    %v1044 = vpack.c.b16 %v888, %v882
    %v1045 = vpack.c.b16 %v889, %v883
    %v1046 = vpack.c.b16 %v890, %v884
    %v1047 = vpack.c.b16 %v891, %v885
    %v1048 = vpack.c.b16 %v898, %v892
    %v1049 = vpack.c.b16 %v899, %v893
    %v1050 = vpack.c.b16 %v900, %v894
    %v1051 = vpack.c.b16 %v901, %v895
    %v1052 = vpack.c.b16 %v902, %v896
    %v1053 = vpack.c.b16 %v903, %v897
    %v1054 = vpack.c.b16 %v910, %v904
    %v1055 = vpack.c.b16 %v911, %v905
    %v1056 = vpack.c.b16 %v912, %v906
    %v1057 = vpack.c.b16 %v913, %v907
    %v1058 = vpack.c.b16 %v914, %v908
    %v1059 = vpack.c.b16 %v915, %v909
    %v1060 = vpack.c.b16 %v922, %v916
    %v1061 = vpack.c.b16 %v923, %v917
    %v1062 = vpack.c.b16 %v924, %v918
    %v1063 = vpack.c.b16 %v925, %v919
    %v1064 = vpack.c.b16 %v926, %v920
    %v1065 = vpack.c.b16 %v927, %v921
    %v1066 = vpack.c.b16 %v934, %v928
    %v1067 = vpack.c.b16 %v935, %v929
    %v1068 = vpack.c.b16 %v936, %v930
    %v1069 = vpack.c.b16 %v937, %v931
    %v1070 = vpack.c.b16 %v938, %v932
    %v1071 = vpack.c.b16 %v939, %v933
    %v1072 = vpack.c.b16 %v946, %v940
    %v1073 = vpack.c.b16 %v947, %v941
    %v1074 = vpack.c.b16 %v948, %v942
    %v1075 = vpack.c.b16 %v949, %v943
    %v1076 = vpack.c.b16 %v950, %v944
    %v1077 = vpack.c.b16 %v951, %v945
    %v1078 = vpack.c.b16 %v958, %v952
    %v1079 = vpack.c.b16 %v959, %v953
    %v1080 = vpack.c.b16 %v960, %v954
    %v1081 = vpack.c.b16 %v961, %v955
    %v1082 = vpack.c.b16 %v962, %v956
    %v1083 = vpack.c.b16 %v963, %v957
    %v1084 = vpack.c.b16 %v970, %v964
    %v1085 = vpack.c.b16 %v971, %v965
    %v1086 = vpack.c.b16 %v972, %v966
    %v1087 = vpack.c.b16 %v973, %v967
    %v1088 = vpack.c.b16 %v974, %v968
    %v1089 = vpack.c.b16 %v975, %v969
    %v1090 = vpack.c.b16 %v982, %v976
    %v1091 = vpack.c.b16 %v983, %v977
    %v1092 = vpack.c.b16 %v984, %v978
    %v1093 = vpack.c.b16 %v985, %v979
    %v1094 = vpack.c.b16 %v986, %v980
    %v1095 = vpack.c.b16 %v987, %v981
    %v1096 = vpack.c.b16 %v994, %v988
    %v1097 = vpack.c.b16 %v995, %v989
    %v1098 = vpack.c.b16 %v996, %v990
    %v1099 = vpack.c.b16 %v997, %v991
    %v1100 = vpack.c.b16 %v998, %v992
    %v1101 = vpack.c.b16 %v999, %v993
    %v1102 = vpack.c.b16 %v1006, %v1000
    %v1103 = vpack.c.b16 %v1007, %v1001
    %v1104 = vpack.c.b16 %v1008, %v1002
    %v1105 = vpack.c.b16 %v1009, %v1003
    %v1106 = vpack.c.b16 %v1010, %v1004
    %v1107 = vpack.c.b16 %v1011, %v1005
    %1204 = vmatprep.subr.bf16.mxu0 %v1013
    %1205 = vmatpush1.bf16.msra.mxu0 %v1012
    %1206 = vmatprep.subr.bf16.mxu0 %v1019
    %1207 = vmatpush1.bf16.msra.mxu0 %v1018
    %1208 = vmatprep.subr.bf16.mxu0 %v1025
    %1209 = vmatpush1.bf16.msra.mxu0 %v1024
    %1210 = vmatprep.subr.bf16.mxu0 %v1031
    %1211 = vmatpush1.bf16.msra.mxu0 %v1030
    %1212 = vmatprep.subr.bf16.mxu0 %v1037
    %1213 = vmatpush1.bf16.msra.mxu0 %v1036
    %1214 = vmatprep.subr.bf16.mxu0 %v1043
    %1215 = vmatpush1.bf16.msra.mxu0 %v1042
    %1216 = vmatprep.subr.bf16.mxu0 %v1049
    %1217 = vmatpush1.bf16.msra.mxu0 %v1048
    %1218 = vmatprep.subr.bf16.mxu0 %v1055
    %1219 = vmatpush1.bf16.msra.mxu0 %v1054
    %1220 = vmatprep.subr.bf16.mxu0 %v1061
    %1221 = vmatpush1.bf16.msra.mxu0 %v1060
    %1222 = vmatprep.subr.bf16.mxu0 %v1067
    %1223 = vmatpush1.bf16.msra.mxu0 %v1066
    %1224 = vmatprep.subr.bf16.mxu0 %v1073
    %1225 = vmatpush1.bf16.msra.mxu0 %v1072
    %1226 = vmatprep.subr.bf16.mxu0 %v1079
    %1227 = vmatpush1.bf16.msra.mxu0 %v1078
    %1228 = vmatprep.subr.bf16.mxu0 %v1085
    %1229 = vmatpush1.bf16.msra.mxu0 %v1084
    %1230 = vmatprep.subr.bf16.mxu0 %v1091
    %1231 = vmatpush1.bf16.msra.mxu0 %v1090
    %1232 = vmatprep.subr.bf16.mxu0 %v1097
    %1233 = vmatpush1.bf16.msra.mxu0 %v1096
    %1234 = vmatprep.subr.bf16.mxu0 %v1103
    %1235 = vmatpush1.bf16.msra.mxu0 %v1102
    %1236 = vmatprep.mubr.bf16.mxu0 %v595
    %1237 = vmatmul.mubr.bf16.gmra.mrb[0].mxu0 %v594
    %v1238 = vpop.f32.mrb[0].mxu0
    %v1239 = vadd.f32 %v697, %v1238
    %v1240 = vpop.f32.mrb[0].mxu0
    %v1241 = vadd.f32 %v701, %v1240
    %v1242 = vpop.f32.mrb[0].mxu0
    %v1243 = vpop.f32.mrb[0].mxu0
    %1244 = vdwg.mxu0
    %1245 = vmatprep.subr.bf16.mxu0 %v1015
    %1246 = vmatpush1.bf16.msra.mxu0 %v1014
    %1247 = vmatprep.subr.bf16.mxu0 %v1021
    %1248 = vmatpush1.bf16.msra.mxu0 %v1020
    %1249 = vmatprep.subr.bf16.mxu0 %v1027
    %1250 = vmatpush1.bf16.msra.mxu0 %v1026
    %1251 = vmatprep.subr.bf16.mxu0 %v1033
    %1252 = vmatpush1.bf16.msra.mxu0 %v1032
    %1253 = vmatprep.subr.bf16.mxu0 %v1039
    %1254 = vmatpush1.bf16.msra.mxu0 %v1038
    %1255 = vmatprep.subr.bf16.mxu0 %v1045
    %1256 = vmatpush1.bf16.msra.mxu0 %v1044
    %1257 = vmatprep.subr.bf16.mxu0 %v1051
    %1258 = vmatpush1.bf16.msra.mxu0 %v1050
    %1259 = vmatprep.subr.bf16.mxu0 %v1057
    %1260 = vmatpush1.bf16.msra.mxu0 %v1056
    %1261 = vmatprep.subr.bf16.mxu0 %v1063
    %1262 = vmatpush1.bf16.msra.mxu0 %v1062
    %1263 = vmatprep.subr.bf16.mxu0 %v1069
    %1264 = vmatpush1.bf16.msra.mxu0 %v1068
    %1265 = vmatprep.subr.bf16.mxu0 %v1075
    %1266 = vmatpush1.bf16.msra.mxu0 %v1074
    %1267 = vmatprep.subr.bf16.mxu0 %v1081
    %1268 = vmatpush1.bf16.msra.mxu0 %v1080
    %1269 = vmatprep.subr.bf16.mxu0 %v1087
    %1270 = vmatpush1.bf16.msra.mxu0 %v1086
    %1271 = vmatprep.subr.bf16.mxu0 %v1093
    %1272 = vmatpush1.bf16.msra.mxu0 %v1092
    %1273 = vmatprep.subr.bf16.mxu0 %v1099
    %1274 = vmatpush1.bf16.msra.mxu0 %v1098
    %1275 = vmatprep.subr.bf16.mxu0 %v1105
    %1276 = vmatpush1.bf16.msra.mxu0 %v1104
    %1277 = vmatprep.mubr.bf16.mxu0 %v595
    %1278 = vmatmul.mubr.bf16.gmra.mrb[0].mxu0 %v594
    %v1279 = vpop.f32.mrb[0].mxu0
    %v1280 = vadd.f32 %v705, %v1279
    %v1281 = vpop.f32.mrb[0].mxu0
    %v1282 = vadd.f32 %v709, %v1281
    %v1283 = vpop.f32.mrb[0].mxu0
    %v1284 = vpop.f32.mrb[0].mxu0
    %1285 = vdwg.mxu0
    %1286 = vmatprep.subr.bf16.mxu0 %v1017
    %1287 = vmatpush1.bf16.msra.mxu0 %v1016
    %1288 = vmatprep.subr.bf16.mxu0 %v1023
    %1289 = vmatpush1.bf16.msra.mxu0 %v1022
    %1290 = vmatprep.subr.bf16.mxu0 %v1029
    %1291 = vmatpush1.bf16.msra.mxu0 %v1028
    %1292 = vmatprep.subr.bf16.mxu0 %v1035
    %1293 = vmatpush1.bf16.msra.mxu0 %v1034
    %1294 = vmatprep.subr.bf16.mxu0 %v1041
    %1295 = vmatpush1.bf16.msra.mxu0 %v1040
    %1296 = vmatprep.subr.bf16.mxu0 %v1047
    %1297 = vmatpush1.bf16.msra.mxu0 %v1046
    %1298 = vmatprep.subr.bf16.mxu0 %v1053
    %1299 = vmatpush1.bf16.msra.mxu0 %v1052
    %1300 = vmatprep.subr.bf16.mxu0 %v1059
    %1301 = vmatpush1.bf16.msra.mxu0 %v1058
    %1302 = vmatprep.subr.bf16.mxu0 %v1065
    %1303 = vmatpush1.bf16.msra.mxu0 %v1064
    %1304 = vmatprep.subr.bf16.mxu0 %v1071
    %1305 = vmatpush1.bf16.msra.mxu0 %v1070
    %1306 = vmatprep.subr.bf16.mxu0 %v1077
    %1307 = vmatpush1.bf16.msra.mxu0 %v1076
    %1308 = vmatprep.subr.bf16.mxu0 %v1083
    %1309 = vmatpush1.bf16.msra.mxu0 %v1082
    %1310 = vmatprep.subr.bf16.mxu0 %v1089
    %1311 = vmatpush1.bf16.msra.mxu0 %v1088
    %1312 = vmatprep.subr.bf16.mxu0 %v1095
    %1313 = vmatpush1.bf16.msra.mxu0 %v1094
    %1314 = vmatprep.subr.bf16.mxu0 %v1101
    %1315 = vmatpush1.bf16.msra.mxu0 %v1100
    %1316 = vmatprep.subr.bf16.mxu0 %v1107
    %1317 = vmatpush1.bf16.msra.mxu0 %v1106
    %1318 = vmatprep.mubr.bf16.mxu0 %v595
    %1319 = vmatmul.mubr.bf16.gmra.mrb[0].mxu0 %v594
    %v1320 = vpop.f32.mrb[0].mxu0
    %v1321 = vadd.f32 %v713, %v1320
    %v1322 = vpop.f32.mrb[0].mxu0
    %v1323 = vadd.f32 %v717, %v1322
    %v1324 = vpop.f32.mrb[0].mxu0
    %v1325 = vpop.f32.mrb[0].mxu0
    %1326 = vdwg.mxu0
    %v1327 = vpack.c.bf16 %v1239, %v1239
    %v1328 = vpack.c.bf16 %v1241, %v1241
    %v1329 = vpack.c.bf16 %v1280, %v1280
    %v1330 = vpack.c.bf16 %v1282, %v1282
    %v1331 = vpack.c.bf16 %v1321, %v1321
    %v1332 = vpack.c.bf16 %v1323, %v1323
    %v1333 = vmul.bf16 %v1327, 1056980736
    %v1334 = vmul.bf16 %v1328, 1056980736
    %v1335 = vtanh.bf16.pop %v1333
    %v1336 = vtanh.bf16.pop %v1334
    %v1337 = vadd.bf16 %v1335, 1065369472
    %v1338 = vadd.bf16 %v1336, 1065369472
    %v1339 = vmul.bf16 %v1337, 1056980736
    %v1340 = vmul.bf16 %v1338, 1056980736
    %v1341 = vtanh.bf16.pop %v1329
    %v1342 = vtanh.bf16.pop %v1330
    %v1343 = vmul.bf16 %v1331, 1056980736
    %v1344 = vmul.bf16 %v1332, 1056980736
    %v1345 = vtanh.bf16.pop %v1343
    %v1346 = vtanh.bf16.pop %v1344
    %v1347 = vadd.bf16 %v1345, 1065369472
    %v1348 = vadd.bf16 %v1346, 1065369472
    %v1349 = vmul.bf16 %v1347, 1056980736
    %v1350 = vmul.bf16 %v1348, 1056980736
    %v1351 = vmul.bf16 %v1339, %v1341
    %v1352 = vmul.bf16 %v1340, %v1342
    %v1353 = vtanh.bf16.pop %v1351
    %v1354 = vtanh.bf16.pop %v1352
    %v1355 = vmul.bf16 %v1349, %v1353
    %v1356 = vmul.bf16 %v1350, %v1354
    %v1357 = vld [vmem:[#allocation8] sm:$0xff]
    %v1358 = vld [vmem:[#allocation8 + $0x8] sm:$0xff]
    %v1359 = vld [vmem:[#allocation8 + $0x10] sm:$0xff]
    %v1360 = vld [vmem:[#allocation8 + $0x18] sm:$0xff]
    %v1361 = vld [vmem:[#allocation8 + $0x20] sm:$0xff]
    %v1362 = vld [vmem:[#allocation8 + $0x28] sm:$0xff]
    %v1363 = vld [vmem:[#allocation8 + $0x30] sm:$0xff]
    %v1364 = vld [vmem:[#allocation8 + $0x38] sm:$0xff]
    %v1365 = vld [vmem:[#allocation8 + $0x40] sm:$0xff]
    %v1366 = vld [vmem:[#allocation8 + $0x48] sm:$0xff]
    %v1367 = vld [vmem:[#allocation8 + $0x50] sm:$0xff]
    %v1368 = vld [vmem:[#allocation8 + $0x58] sm:$0xff]
    %v1369 = vld [vmem:[#allocation8 + $0x60] sm:$0xff]
    %v1370 = vld [vmem:[#allocation8 + $0x68] sm:$0xff]
    %v1371 = vld [vmem:[#allocation8 + $0x70] sm:$0xff]
    %v1372 = vld [vmem:[#allocation8 + $0x78] sm:$0xff]
    %v1373 = vld [vmem:[#allocation8 + $0x80] sm:$0xff]
    %v1374 = vld [vmem:[#allocation8 + $0x88] sm:$0xff]
    %v1375 = vld [vmem:[#allocation8 + $0x90] sm:$0xff]
    %v1376 = vld [vmem:[#allocation8 + $0x98] sm:$0xff]
    %v1377 = vld [vmem:[#allocation8 + $0xa0] sm:$0xff]
    %v1378 = vld [vmem:[#allocation8 + $0xa8] sm:$0xff]
    %v1379 = vld [vmem:[#allocation8 + $0xb0] sm:$0xff]
    %v1380 = vld [vmem:[#allocation8 + $0xb8] sm:$0xff]
    %v1381 = vld [vmem:[#allocation8 + $0xc0] sm:$0xff]
    %v1382 = vld [vmem:[#allocation8 + $0xc8] sm:$0xff]
    %v1383 = vld [vmem:[#allocation8 + $0xd0] sm:$0xff]
    %v1384 = vld [vmem:[#allocation8 + $0xd8] sm:$0xff]
    %v1385 = vld [vmem:[#allocation8 + $0xe0] sm:$0xff]
    %v1386 = vld [vmem:[#allocation8 + $0xe8] sm:$0xff]
    %v1387 = vld [vmem:[#allocation8 + $0xf0] sm:$0xff]
    %v1388 = vld [vmem:[#allocation8 + $0xf8] sm:$0xff]
    %v1389 = vld [vmem:[%s6] sm:$0x3]
    %v1391 = vlaneseq
    %v1392 = vshrl.u32 %v1391, 7
    %v1393 = vsub.s32 0, %v1392
    %v1394 = vrot.slane %v1389, %v1393
    %v1395 = vlaneseq
    %v1396 = vshrl.u32 %v1395, 7
    %v1397 = vsub.s32 1, %v1396
    %v1398 = vrot.slane %v1389, %v1397
    %v1433 = vunpack.c.l.b16 %v1357
    %v1434 = vunpack.c.h.b16 %v1357
    %v1435 = vunpack.c.l.b16 %v1358
    %v1436 = vunpack.c.h.b16 %v1358
    %v1437 = vunpack.c.l.b16 %v1359
    %v1438 = vunpack.c.h.b16 %v1359
    %v1439 = vunpack.c.l.b16 %v1360
    %v1440 = vunpack.c.h.b16 %v1360
    %v1441 = vunpack.c.l.b16 %v1361
    %v1442 = vunpack.c.h.b16 %v1361
    %v1443 = vunpack.c.l.b16 %v1362
    %v1444 = vunpack.c.h.b16 %v1362
    %v1445 = vunpack.c.l.b16 %v1363
    %v1446 = vunpack.c.h.b16 %v1363
    %v1447 = vunpack.c.l.b16 %v1364
    %v1448 = vunpack.c.h.b16 %v1364
    %v1449 = vunpack.c.l.b16 %v1365
    %v1450 = vunpack.c.h.b16 %v1365
    %v1451 = vunpack.c.l.b16 %v1366
    %v1452 = vunpack.c.h.b16 %v1366
    %v1453 = vunpack.c.l.b16 %v1367
    %v1454 = vunpack.c.h.b16 %v1367
    %v1455 = vunpack.c.l.b16 %v1368
    %v1456 = vunpack.c.h.b16 %v1368
    %v1457 = vunpack.c.l.b16 %v1369
    %v1458 = vunpack.c.h.b16 %v1369
    %v1459 = vunpack.c.l.b16 %v1370
    %v1460 = vunpack.c.h.b16 %v1370
    %v1461 = vunpack.c.l.b16 %v1371
    %v1462 = vunpack.c.h.b16 %v1371
    %v1463 = vunpack.c.l.b16 %v1372
    %v1464 = vunpack.c.h.b16 %v1372
    %v1465 = vunpack.c.l.b16 %v1373
    %v1466 = vunpack.c.h.b16 %v1373
    %v1467 = vunpack.c.l.b16 %v1374
    %v1468 = vunpack.c.h.b16 %v1374
    %v1469 = vunpack.c.l.b16 %v1375
    %v1470 = vunpack.c.h.b16 %v1375
    %v1471 = vunpack.c.l.b16 %v1376
    %v1472 = vunpack.c.h.b16 %v1376
    %v1473 = vunpack.c.l.b16 %v1377
    %v1474 = vunpack.c.h.b16 %v1377
    %v1475 = vunpack.c.l.b16 %v1378
    %v1476 = vunpack.c.h.b16 %v1378
    %v1477 = vunpack.c.l.b16 %v1379
    %v1478 = vunpack.c.h.b16 %v1379
    %v1479 = vunpack.c.l.b16 %v1380
    %v1480 = vunpack.c.h.b16 %v1380
    %v1481 = vunpack.c.l.b16 %v1381
    %v1482 = vunpack.c.h.b16 %v1381
    %v1483 = vunpack.c.l.b16 %v1382
    %v1484 = vunpack.c.h.b16 %v1382
    %v1485 = vunpack.c.l.b16 %v1383
    %v1486 = vunpack.c.h.b16 %v1383
    %v1487 = vunpack.c.l.b16 %v1384
    %v1488 = vunpack.c.h.b16 %v1384
    %v1489 = vunpack.c.l.b16 %v1385
    %v1490 = vunpack.c.h.b16 %v1385
    %v1491 = vunpack.c.l.b16 %v1386
    %v1492 = vunpack.c.h.b16 %v1386
    %v1493 = vunpack.c.l.b16 %v1387
    %v1494 = vunpack.c.h.b16 %v1387
    %v1495 = vunpack.c.l.b16 %v1388
    %v1496 = vunpack.c.h.b16 %v1388
    %v1497 = vpack.c.b16 %v1435, %v1433
    %v1498 = vpack.c.b16 %v1436, %v1434
    %v1499 = vpack.c.b16 %v1439, %v1437
    %v1500 = vpack.c.b16 %v1440, %v1438
    %v1501 = vpack.c.b16 %v1443, %v1441
    %v1502 = vpack.c.b16 %v1444, %v1442
    %v1503 = vpack.c.b16 %v1447, %v1445
    %v1504 = vpack.c.b16 %v1448, %v1446
    %v1505 = vpack.c.b16 %v1451, %v1449
    %v1506 = vpack.c.b16 %v1452, %v1450
    %v1507 = vpack.c.b16 %v1455, %v1453
    %v1508 = vpack.c.b16 %v1456, %v1454
    %v1509 = vpack.c.b16 %v1459, %v1457
    %v1510 = vpack.c.b16 %v1460, %v1458
    %v1511 = vpack.c.b16 %v1463, %v1461
    %v1512 = vpack.c.b16 %v1464, %v1462
    %v1513 = vpack.c.b16 %v1467, %v1465
    %v1514 = vpack.c.b16 %v1468, %v1466
    %v1515 = vpack.c.b16 %v1471, %v1469
    %v1516 = vpack.c.b16 %v1472, %v1470
    %v1517 = vpack.c.b16 %v1475, %v1473
    %v1518 = vpack.c.b16 %v1476, %v1474
    %v1519 = vpack.c.b16 %v1479, %v1477
    %v1520 = vpack.c.b16 %v1480, %v1478
    %v1521 = vpack.c.b16 %v1483, %v1481
    %v1522 = vpack.c.b16 %v1484, %v1482
    %v1523 = vpack.c.b16 %v1487, %v1485
    %v1524 = vpack.c.b16 %v1488, %v1486
    %v1525 = vpack.c.b16 %v1491, %v1489
    %v1526 = vpack.c.b16 %v1492, %v1490
    %v1527 = vpack.c.b16 %v1495, %v1493
    %v1528 = vpack.c.b16 %v1496, %v1494
    %1561 = vmatprep.subr.bf16.mxu0 %v1498
    %1562 = vmatpush1.bf16.msra.mxu0 %v1497
    %1563 = vmatprep.subr.bf16.mxu0 %v1500
    %1564 = vmatpush1.bf16.msra.mxu0 %v1499
    %1565 = vmatprep.subr.bf16.mxu0 %v1502
    %1566 = vmatpush1.bf16.msra.mxu0 %v1501
    %1567 = vmatprep.subr.bf16.mxu0 %v1504
    %1568 = vmatpush1.bf16.msra.mxu0 %v1503
    %1569 = vmatprep.subr.bf16.mxu0 %v1506
    %1570 = vmatpush1.bf16.msra.mxu0 %v1505
    %1571 = vmatprep.subr.bf16.mxu0 %v1508
    %1572 = vmatpush1.bf16.msra.mxu0 %v1507
    %1573 = vmatprep.subr.bf16.mxu0 %v1510
    %1574 = vmatpush1.bf16.msra.mxu0 %v1509
    %1575 = vmatprep.subr.bf16.mxu0 %v1512
    %1576 = vmatpush1.bf16.msra.mxu0 %v1511
    %1577 = vmatprep.subr.bf16.mxu0 %v1514
    %1578 = vmatpush1.bf16.msra.mxu0 %v1513
    %1579 = vmatprep.subr.bf16.mxu0 %v1516
    %1580 = vmatpush1.bf16.msra.mxu0 %v1515
    %1581 = vmatprep.subr.bf16.mxu0 %v1518
    %1582 = vmatpush1.bf16.msra.mxu0 %v1517
    %1583 = vmatprep.subr.bf16.mxu0 %v1520
    %1584 = vmatpush1.bf16.msra.mxu0 %v1519
    %1585 = vmatprep.subr.bf16.mxu0 %v1522
    %1586 = vmatpush1.bf16.msra.mxu0 %v1521
    %1587 = vmatprep.subr.bf16.mxu0 %v1524
    %1588 = vmatpush1.bf16.msra.mxu0 %v1523
    %1589 = vmatprep.subr.bf16.mxu0 %v1526
    %1590 = vmatpush1.bf16.msra.mxu0 %v1525
    %1591 = vmatprep.subr.bf16.mxu0 %v1528
    %1592 = vmatpush1.bf16.msra.mxu0 %v1527
    %1593 = vmatprep.mubr.bf16.mxu0 %v1356
    %1594 = vmatmul.mubr.bf16.gmra.mrb[0].mxu0 %v1355
    %v1595 = vpop.f32.mrb[0].mxu0
    %v1596 = vadd.f32 %v1394, %v1595
    %v1597 = vpop.f32.mrb[0].mxu0
    %v1598 = vadd.f32 %v1398, %v1597
    %v1599 = vpop.f32.mrb[0].mxu0
    %v1600 = vpop.f32.mrb[0].mxu0
    %1601 = vdwg.mxu0
    %vm1602 = vcmp.ge.f32.partialorder %v1596, 0.0
    %vm1603 = vcmp.ge.f32.partialorder %v1598, 0.0
    %v1604 = vmul.f32 %v1596, 0.01
    %v1605 = vmul.f32 %v1598, 0.01
    %v1606 = vsel %vm1602, %v1596, %v1604
    %v1607 = vsel %vm1603, %v1598, %v1605
    %v1608 = vunpack.c.l.bf16 %v1355
    %v1609 = vunpack.c.l.bf16 %v1356
    %v1610 = vadd.f32 %v1606, %v1608
    %v1611 = vadd.f32 %v1607, %v1609
    %v1612 = vpack.c.bf16 %v1610, %v1610
    %v1613 = vpack.c.bf16 %v1611, %v1611
    %v1614 = vld [vmem:[#allocation10] sm:$0xf]
    %v1615 = vld [vmem:[#allocation10 + $0x4] sm:$0xf]
    %v1616 = vld [vmem:[#allocation10 + $0x8] sm:$0xf]
    %v1617 = vld [vmem:[#allocation10 + $0xc] sm:$0xf]
    %v1618 = vld [vmem:[#allocation10 + $0x10] sm:$0xf]
    %v1619 = vld [vmem:[#allocation10 + $0x14] sm:$0xf]
    %v1620 = vld [vmem:[#allocation10 + $0x18] sm:$0xf]
    %v1621 = vld [vmem:[#allocation10 + $0x1c] sm:$0xf]
    %v1622 = vld [vmem:[#allocation10 + $0x20] sm:$0xf]
    %v1623 = vld [vmem:[#allocation10 + $0x24] sm:$0xf]
    %v1624 = vld [vmem:[#allocation10 + $0x28] sm:$0xf]
    %v1625 = vld [vmem:[#allocation10 + $0x2c] sm:$0xf]
    %v1626 = vld [vmem:[#allocation10 + $0x30] sm:$0xf]
    %v1627 = vld [vmem:[#allocation10 + $0x34] sm:$0xf]
    %v1628 = vld [vmem:[#allocation10 + $0x38] sm:$0xf]
    %v1629 = vld [vmem:[#allocation10 + $0x3c] sm:$0xf]
    %v1630 = vld [vmem:[#allocation10 + $0x40] sm:$0xf]
    %v1631 = vld [vmem:[#allocation10 + $0x44] sm:$0xf]
    %v1632 = vld [vmem:[#allocation10 + $0x48] sm:$0xf]
    %v1633 = vld [vmem:[#allocation10 + $0x4c] sm:$0xf]
    %v1634 = vld [vmem:[#allocation10 + $0x50] sm:$0xf]
    %v1635 = vld [vmem:[#allocation10 + $0x54] sm:$0xf]
    %v1636 = vld [vmem:[#allocation10 + $0x58] sm:$0xf]
    %v1637 = vld [vmem:[#allocation10 + $0x5c] sm:$0xf]
    %v1638 = vld [vmem:[#allocation10 + $0x60] sm:$0xf]
    %v1639 = vld [vmem:[#allocation10 + $0x64] sm:$0xf]
    %v1640 = vld [vmem:[#allocation10 + $0x68] sm:$0xf]
    %v1641 = vld [vmem:[#allocation10 + $0x6c] sm:$0xf]
    %v1642 = vld [vmem:[#allocation10 + $0x70] sm:$0xf]
    %v1643 = vld [vmem:[#allocation10 + $0x74] sm:$0xf]
    %v1644 = vld [vmem:[#allocation10 + $0x78] sm:$0xf]
    %v1645 = vld [vmem:[#allocation10 + $0x7c] sm:$0xf]
    %v1646 = vld [vmem:[%s8] sm:$0x1]
    %v1648 = vlaneseq
    %v1649 = vshrl.u32 %v1648, 7
    %v1650 = vsub.s32 0, %v1649
    %v1651 = vrot.slane %v1646, %v1650
    %v1685 = vunpack.c.l.b16 %v1614
    %v1686 = vunpack.c.l.b16 %v1615
    %v1687 = vunpack.c.l.b16 %v1616
    %v1688 = vunpack.c.l.b16 %v1617
    %v1689 = vunpack.c.l.b16 %v1618
    %v1690 = vunpack.c.l.b16 %v1619
    %v1691 = vunpack.c.l.b16 %v1620
    %v1692 = vunpack.c.l.b16 %v1621
    %v1693 = vunpack.c.l.b16 %v1622
    %v1694 = vunpack.c.l.b16 %v1623
    %v1695 = vunpack.c.l.b16 %v1624
    %v1696 = vunpack.c.l.b16 %v1625
    %v1697 = vunpack.c.l.b16 %v1626
    %v1698 = vunpack.c.l.b16 %v1627
    %v1699 = vunpack.c.l.b16 %v1628
    %v1700 = vunpack.c.l.b16 %v1629
    %v1701 = vunpack.c.l.b16 %v1630
    %v1702 = vunpack.c.l.b16 %v1631
    %v1703 = vunpack.c.l.b16 %v1632
    %v1704 = vunpack.c.l.b16 %v1633
    %v1705 = vunpack.c.l.b16 %v1634
    %v1706 = vunpack.c.l.b16 %v1635
    %v1707 = vunpack.c.l.b16 %v1636
    %v1708 = vunpack.c.l.b16 %v1637
    %v1709 = vunpack.c.l.b16 %v1638
    %v1710 = vunpack.c.l.b16 %v1639
    %v1711 = vunpack.c.l.b16 %v1640
    %v1712 = vunpack.c.l.b16 %v1641
    %v1713 = vunpack.c.l.b16 %v1642
    %v1714 = vunpack.c.l.b16 %v1643
    %v1715 = vunpack.c.l.b16 %v1644
    %v1716 = vunpack.c.l.b16 %v1645
    %v1717 = vpack.c.b16 %v1686, %v1685
    %v1718 = vpack.c.b16 %v1688, %v1687
    %v1719 = vpack.c.b16 %v1690, %v1689
    %v1720 = vpack.c.b16 %v1692, %v1691
    %v1721 = vpack.c.b16 %v1694, %v1693
    %v1722 = vpack.c.b16 %v1696, %v1695
    %v1723 = vpack.c.b16 %v1698, %v1697
    %v1724 = vpack.c.b16 %v1700, %v1699
    %v1725 = vpack.c.b16 %v1702, %v1701
    %v1726 = vpack.c.b16 %v1704, %v1703
    %v1727 = vpack.c.b16 %v1706, %v1705
    %v1728 = vpack.c.b16 %v1708, %v1707
    %v1729 = vpack.c.b16 %v1710, %v1709
    %v1730 = vpack.c.b16 %v1712, %v1711
    %v1731 = vpack.c.b16 %v1714, %v1713
    %v1732 = vpack.c.b16 %v1716, %v1715
    %1749 = vmatprep.subr.bf16.mxu0 0
    %1750 = vmatpush1.bf16.msra.mxu0 %v1717
    %1751 = vmatprep.subr.bf16.mxu0 0
    %1752 = vmatpush1.bf16.msra.mxu0 %v1718
    %1753 = vmatprep.subr.bf16.mxu0 0
    %1754 = vmatpush1.bf16.msra.mxu0 %v1719
    %1755 = vmatprep.subr.bf16.mxu0 0
    %1756 = vmatpush1.bf16.msra.mxu0 %v1720
    %1757 = vmatprep.subr.bf16.mxu0 0
    %1758 = vmatpush1.bf16.msra.mxu0 %v1721
    %1759 = vmatprep.subr.bf16.mxu0 0
    %1760 = vmatpush1.bf16.msra.mxu0 %v1722
    %1761 = vmatprep.subr.bf16.mxu0 0
    %1762 = vmatpush1.bf16.msra.mxu0 %v1723
    %1763 = vmatprep.subr.bf16.mxu0 0
    %1764 = vmatpush1.bf16.msra.mxu0 %v1724
    %1765 = vmatprep.subr.bf16.mxu0 0
    %1766 = vmatpush1.bf16.msra.mxu0 %v1725
    %1767 = vmatprep.subr.bf16.mxu0 0
    %1768 = vmatpush1.bf16.msra.mxu0 %v1726
    %1769 = vmatprep.subr.bf16.mxu0 0
    %1770 = vmatpush1.bf16.msra.mxu0 %v1727
    %1771 = vmatprep.subr.bf16.mxu0 0
    %1772 = vmatpush1.bf16.msra.mxu0 %v1728
    %1773 = vmatprep.subr.bf16.mxu0 0
    %1774 = vmatpush1.bf16.msra.mxu0 %v1729
    %1775 = vmatprep.subr.bf16.mxu0 0
    %1776 = vmatpush1.bf16.msra.mxu0 %v1730
    %1777 = vmatprep.subr.bf16.mxu0 0
    %1778 = vmatpush1.bf16.msra.mxu0 %v1731
    %1779 = vmatprep.subr.bf16.mxu0 0
    %1780 = vmatpush1.bf16.msra.mxu0 %v1732
    %1781 = vmatprep.mubr.bf16.mxu0 %v1613
    %1782 = vmatmul.mubr.bf16.gmra.mrb[0].mxu0 %v1612
    %v1783 = vpop.f32.mrb[0].mxu0
    %v1784 = vadd.f32 %v1651, %v1783
    %v1785 = vpop.f32.mrb[0].mxu0
    %v1786 = vpop.f32.mrb[0].mxu0
    %v1787 = vpop.f32.mrb[0].mxu0
    %1788 = vdwg.mxu0
    %vm1789 = vcmp.ge.f32.partialorder %v1784, 0.0
    %v1790 = vmul.f32 %v1784, 0.01
    %v1791 = vsel %vm1789, %v1784, %v1790
    %v1792 = vpack.c.bf16 %v1791, %v1791
    %v1793 = vld [vmem:[#allocation11] sm:$0xf]
    %v1794 = vld [vmem:[#allocation11 + $0x4] sm:$0xf]
    %v1795 = vld [vmem:[#allocation11 + $0x8] sm:$0xf]
    %v1796 = vld [vmem:[#allocation11 + $0xc] sm:$0xf]
    %v1797 = vld [vmem:[#allocation11 + $0x10] sm:$0xf]
    %v1798 = vld [vmem:[#allocation11 + $0x14] sm:$0xf]
    %v1799 = vld [vmem:[#allocation11 + $0x18] sm:$0xf]
    %v1800 = vld [vmem:[#allocation11 + $0x1c] sm:$0xf]
    %v1801 = vld [vmem:[#allocation11 + $0x20] sm:$0xf]
    %v1802 = vld [vmem:[#allocation11 + $0x24] sm:$0xf]
    %v1803 = vld [vmem:[#allocation11 + $0x28] sm:$0xf]
    %v1804 = vld [vmem:[#allocation11 + $0x2c] sm:$0xf]
    %v1805 = vld [vmem:[#allocation11 + $0x30] sm:$0xf]
    %v1806 = vld [vmem:[#allocation11 + $0x34] sm:$0xf]
    %v1807 = vld [vmem:[#allocation11 + $0x38] sm:$0xf]
    %v1808 = vld [vmem:[#allocation11 + $0x3c] sm:$0xf]
    %v1809 = vld [vmem:[%s10] sm:$0x1]
    %v1811 = vlaneseq
    %v1812 = vshrl.u32 %v1811, 7
    %v1813 = vsub.s32 0, %v1812
    %v1814 = vrot.slane %v1809, %v1813
    %v1832 = vunpack.c.l.b16 %v1793
    %v1833 = vunpack.c.l.b16 %v1794
    %v1834 = vunpack.c.l.b16 %v1795
    %v1835 = vunpack.c.l.b16 %v1796
    %v1836 = vunpack.c.l.b16 %v1797
    %v1837 = vunpack.c.l.b16 %v1798
    %v1838 = vunpack.c.l.b16 %v1799
    %v1839 = vunpack.c.l.b16 %v1800
    %v1840 = vunpack.c.l.b16 %v1801
    %v1841 = vunpack.c.l.b16 %v1802
    %v1842 = vunpack.c.l.b16 %v1803
    %v1843 = vunpack.c.l.b16 %v1804
    %v1844 = vunpack.c.l.b16 %v1805
    %v1845 = vunpack.c.l.b16 %v1806
    %v1846 = vunpack.c.l.b16 %v1807
    %v1847 = vunpack.c.l.b16 %v1808
    %v1848 = vpack.c.b16 %v1833, %v1832
    %v1849 = vpack.c.b16 %v1835, %v1834
    %v1850 = vpack.c.b16 %v1837, %v1836
    %v1851 = vpack.c.b16 %v1839, %v1838
    %v1852 = vpack.c.b16 %v1841, %v1840
    %v1853 = vpack.c.b16 %v1843, %v1842
    %v1854 = vpack.c.b16 %v1845, %v1844
    %v1855 = vpack.c.b16 %v1847, %v1846
    %1864 = vmatprep.subr.bf16.mxu0 0
    %1865 = vmatpush1.bf16.msra.mxu0 %v1848
    %1866 = vmatprep.subr.bf16.mxu0 0
    %1867 = vmatpush1.bf16.msra.mxu0 %v1849
    %1868 = vmatprep.subr.bf16.mxu0 0
    %1869 = vmatpush1.bf16.msra.mxu0 %v1850
    %1870 = vmatprep.subr.bf16.mxu0 0
    %1871 = vmatpush1.bf16.msra.mxu0 %v1851
    %1872 = vmatprep.subr.bf16.mxu0 0
    %1873 = vmatpush1.bf16.msra.mxu0 %v1852
    %1874 = vmatprep.subr.bf16.mxu0 0
    %1875 = vmatpush1.bf16.msra.mxu0 %v1853
    %1876 = vmatprep.subr.bf16.mxu0 0
    %1877 = vmatpush1.bf16.msra.mxu0 %v1854
    %1878 = vmatprep.subr.bf16.mxu0 0
    %1879 = vmatpush1.bf16.msra.mxu0 %v1855
    %1880 = vmatprep.subr.bf16.mxu0 0
    %1881 = vmatpush1.bf16.msra.mxu0 0
    %1882 = vmatprep.subr.bf16.mxu0 0
    %1883 = vmatpush1.bf16.msra.mxu0 0
    %1884 = vmatprep.subr.bf16.mxu0 0
    %1885 = vmatpush1.bf16.msra.mxu0 0
    %1886 = vmatprep.subr.bf16.mxu0 0
    %1887 = vmatpush1.bf16.msra.mxu0 0
    %1888 = vmatprep.subr.bf16.mxu0 0
    %1889 = vmatpush1.bf16.msra.mxu0 0
    %1890 = vmatprep.subr.bf16.mxu0 0
    %1891 = vmatpush1.bf16.msra.mxu0 0
    %1892 = vmatprep.subr.bf16.mxu0 0
    %1893 = vmatpush1.bf16.msra.mxu0 0
    %1894 = vmatprep.subr.bf16.mxu0 0
    %1895 = vmatpush1.bf16.msra.mxu0 0
    %1896 = vmatprep.mubr.bf16.mxu0 0
    %1897 = vmatmul.mubr.bf16.gmra.mrb[0].mxu0 %v1792
    %v1898 = vpop.f32.mrb[0].mxu0
    %v1899 = vadd.f32 %v1814, %v1898
    %v1900 = vpop.f32.mrb[0].mxu0
    %v1901 = vpop.f32.mrb[0].mxu0
    %v1902 = vpop.f32.mrb[0].mxu0
    %1903 = vdwg.mxu0
    %v1904 = vpack.c.bf16 %v1899, %v1899
    %1905 = vst [vmem:[#allocation13] sm:$0xf] %v1904
    // Predicated region
    $region70: #{tpu_custom_call.1} parent=1 // pred_check
      _
    $region71: #{tpu_custom_call.1} parent=1 // pred_check_branch
      %1907 = sbr.rel (0) target = $region73
    $region72: #{tpu_custom_call.1} parent=1 // pred_region
      %s1909 = ssub.s32 64, 64
      %1910 = vsyncadd [#allocation4], %s1909
      %s1912 = sshll.u32 [#allocation13], 4
      %s1913 = int_to_ptr.vmem [resolvable:$true] %s1912
      %1915 = dma.vmem_to_hbm [thread:$0]  %s1913, 64, %s11, [#allocation4]
    $region73: #{tpu_custom_call.1} parent=1 // pred_fallthru
      _
    // Predicated region
    $region74: #{tpu_custom_call.1} parent=1 // pred_check
      _
    $region75: #{tpu_custom_call.1} parent=1 // pred_check_branch
      %1917 = sbr.rel (0) target = $region77
    $region76: #{tpu_custom_call.1} parent=1 // pred_region
      %1918 = dma.done [#allocation4], 64
    $region77: #{tpu_custom_call.1} parent=1 // pred_fallthru
      _
    %1919 = vsyncpa [#allocation3], 1
    %1920 = vsyncpa [#allocation6], 1
    %1921 = vsyncpa [#allocation9], 1
    %1922 = vsyncpa [#allocation12], 1
    %1923 = vsyncpa [#allocation4], 1

</llo_original>
